<compile_context>
chip_gen: v7x
topology: tpu7x:2x2x1
jax: 0.10.0
libtpu: 0.0.40
codegen_flags: <defaults>
</compile_context>

<pallas_src>
import functools

import jax
import jax.numpy as jnp
from jax import lax
from jax.experimental import pallas as pl
from jax.experimental.pallas import tpu as pltpu


def mha_kernel(q_ref, k_ref, v_ref,
               wq_ref, wk_ref, wv_ref, wo_ref,
               gamma_ref, beta_ref,
               out_ref, attn_ref,
               k_scratch, v_scratch,
               *, n_heads, d_k, d_v, ln_eps, compute_dtype):
    qi = pl.program_id(1)

    # ---- K/V projections: once per batch element, cached in VMEM scratch ----
    @pl.when(qi == 0)
    def _():
        xk = k_ref[0].astype(compute_dtype)
        xv = v_ref[0].astype(compute_dtype)
        k_scratch[...] = jnp.dot(
            xk, wk_ref[...], preferred_element_type=jnp.float32
        ).astype(compute_dtype)                                     # [L, H*dk]
        v_scratch[...] = jnp.dot(
            xv, wv_ref[...], preferred_element_type=jnp.float32
        ).astype(compute_dtype)                                     # [L, H*dv]

    # ---- Q projection (1/sqrt(d_k) already folded into wq) ----
    xq_f32 = q_ref[0].astype(jnp.float32)                           # residual (exact f32)
    q_proj = jnp.dot(xq_f32.astype(compute_dtype), wq_ref[...],
                     preferred_element_type=jnp.float32)            # [TQ, H*dk] f32
    q_proj = q_proj.astype(compute_dtype)

    k_proj = k_scratch[...]                                         # [L, H*dk]
    v_proj = v_scratch[...]                                         # [L, H*dv]

    # ---- per-head scaled-dot-product attention (static lane slices) ----
    ctx_heads = []
    for h in range(n_heads):
        qh = q_proj[:, h * d_k:(h + 1) * d_k]                       # [TQ, dk]
        kh = k_proj[:, h * d_k:(h + 1) * d_k]                       # [L,  dk]
        vh = v_proj[:, h * d_v:(h + 1) * d_v]                       # [L,  dv]
        # q @ k^T without materializing a transpose: contract axis 1 / axis 1.
        s = lax.dot_general(qh, kh, (((1,), (1,)), ((), ())),
                            preferred_element_type=jnp.float32)     # [TQ, L] f32
        m = jnp.max(s, axis=-1, keepdims=True)
        e = jnp.exp(s - m)
        denom = jnp.sum(e, axis=-1, keepdims=True)
        p = e * pl.reciprocal(denom, approx=True)                   # [TQ, L] f32
        attn_ref[0, h] = p.astype(attn_ref.dtype)
        ctx_heads.append(jnp.dot(p.astype(compute_dtype), vh,
                                 preferred_element_type=jnp.float32))  # [TQ, dv] f32
    ctx = jnp.concatenate(ctx_heads, axis=-1)                       # [TQ, H*dv] f32

    # ---- output projection + residual + LayerNorm (f32 vector math) ----
    out = jnp.dot(ctx.astype(compute_dtype), wo_ref[...],
                  preferred_element_type=jnp.float32)               # [TQ, d_model]
    out = out + xq_f32

    mu = jnp.mean(out, axis=-1, keepdims=True)
    var = jnp.mean((out - mu) ** 2, axis=-1, keepdims=True)
    normed = (out - mu) * lax.rsqrt(var + ln_eps)
    normed = normed * gamma_ref[0] + beta_ref[0]

    out_ref[0] = normed.astype(out_ref.dtype)


def multi_head_attention(q, k, v, params, *, n_heads, d_k, d_v, ln_eps=1e-6,
                         block_q=256, compute_dtype=jnp.bfloat16):
    """q, k, v: [B, L, d_model]. Returns (output [B, L, d_model], attn [B, H, L, L])."""
    B, L, d_model = q.shape
    wq, wk, wv, wo, gamma, beta = params

    # Query tile: multiple of 8 that divides L (fall back to full sequence).
    tq = min(block_q, L)
    if L % tq != 0 or tq % 8 != 0:
        tq = L
    n_q = L // tq

    # Pre-transpose weights once (outside the kernel); fold the attention scale
    # into wq; cast MXU operands to compute_dtype (halves weight DMA for bf16).
    scale = 1.0 / (d_k ** 0.5)
    wq_t = (wq.T * scale).astype(compute_dtype)     # [d_model, H*dk]
    wk_t = wk.T.astype(compute_dtype)               # [d_model, H*dk]
    wv_t = wv.T.astype(compute_dtype)               # [d_model, H*dv]
    wo_t = wo.T.astype(compute_dtype)               # [H*dv, d_model]

    kernel = functools.partial(mha_kernel, n_heads=n_heads, d_k=d_k, d_v=d_v,
                               ln_eps=ln_eps, compute_dtype=compute_dtype)

    q_spec = pl.BlockSpec((1, tq, d_model), lambda b, i: (b, i, 0))
    kv_spec = pl.BlockSpec((1, L, d_model), lambda b, i: (b, 0, 0))
    full2d = lambda shape: pl.BlockSpec(shape, lambda b, i: (0, 0))

    # Rough VMEM budget (double-buffered blocks + scratch + live intermediates),
    # 2x fudge, clamped to stay within every generation's physical VMEM
    # (v7x has only 64 MiB per TensorCore, so stay well under).
    cb = jnp.dtype(compute_dtype).itemsize
    est = (2 * tq * d_model * 4                       # q block
           + 2 * 2 * L * d_model * 4                  # k, v blocks
           + 2 * tq * d_model * 4                     # out block
           + 2 * n_heads * tq * L * 4                 # attn block
           + 2 * 2 * d_model * n_heads * (d_k + d_v) * cb   # weights
           + 2 * 2 * d_model * 4                      # gamma/beta
           + L * n_heads * (d_k + d_v) * cb           # kv scratch
           + 8 * tq * max(L, d_model) * 4)            # intermediates (fudge)
    vmem_limit = int(min(max(2 * est, 8 << 20), 48 << 20))

    flops = (2 * B * L * d_model * n_heads * (2 * d_k + d_v)   # QKV projections
             + 2 * B * n_heads * L * L * (d_k + d_v)           # scores + ctx
             + 2 * B * L * n_heads * d_v * d_model)            # output projection
    bytes_accessed = (4 * B * L * d_model * 4
                      + 2 * d_model * n_heads * (d_k + d_v) * cb
                      + 2 * d_model * 4
                      + B * n_heads * L * L * 4)
    cost = pl.CostEstimate(flops=flops,
                           transcendentals=B * n_heads * L * L + B * L,
                           bytes_accessed=bytes_accessed)

    out, attn = pl.pallas_call(
        kernel,
        out_shape=(
            jax.ShapeDtypeStruct((B, L, d_model), q.dtype),
            jax.ShapeDtypeStruct((B, n_heads, L, L), jnp.float32),
        ),
        grid_spec=pltpu.PrefetchScalarGridSpec(
            num_scalar_prefetch=0,
            grid=(B, n_q),
            in_specs=[
                q_spec,                    # q  [B, L, d_model]
                kv_spec,                   # k
                kv_spec,                   # v
                full2d(wq_t.shape),        # [d_model, H*dk] (pre-scaled)
                full2d(wk_t.shape),        # [d_model, H*dk]
                full2d(wv_t.shape),        # [d_model, H*dv]
                full2d(wo_t.shape),        # [H*dv, d_model]
                full2d(gamma.shape),       # [1, d_model]
                full2d(beta.shape),        # [1, d_model]
            ],
            out_specs=[
                pl.BlockSpec((1, tq, d_model), lambda b, i: (b, i, 0)),
                pl.BlockSpec((1, n_heads, tq, L), lambda b, i: (b, 0, i, 0)),
            ],
            scratch_shapes=[
                pltpu.VMEM((L, n_heads * d_k), compute_dtype),   # K projection cache
                pltpu.VMEM((L, n_heads * d_v), compute_dtype),   # V projection cache
            ],
        ),
        compiler_params=pltpu.CompilerParams(
            dimension_semantics=("parallel", "arbitrary"),
            vmem_limit_bytes=vmem_limit),
        cost_estimate=cost,
    )(q, k, v, wq_t, wk_t, wv_t, wo_t, gamma, beta)
    return out, attn


def init_params(key, d_model, d_k, d_v, n_heads):
    """Deterministic init mimicking nn.Linear default (uniform(-1/sqrt(in), 1/sqrt(in)))."""
    k1, k2, k3, k4 = jax.random.split(key, 4)

    def lin(kk, out_f, in_f):
        bound = 1.0 / (in_f ** 0.5)
        return jax.random.uniform(kk, (out_f, in_f), jnp.float32, -bound, bound)

    wq = lin(k1, d_k * n_heads, d_model)
    wk = lin(k2, d_k * n_heads, d_model)
    wv = lin(k3, d_v * n_heads, d_model)
    wo = lin(k4, d_model, n_heads * d_v)
    gamma = jnp.ones((1, d_model), jnp.float32)
    beta = jnp.zeros((1, d_model), jnp.float32)
    return wq, wk, wv, wo, gamma, beta


def reference_mha(q, k, v, params, *, n_heads, d_k, d_v, ln_eps=1e-6):
    """Pure-JAX reference (eval mode, no dropout) for sanity checking."""
    wq, wk, wv, wo, gamma, beta = params
    B, L, D = q.shape
    residual = q
    Q = (q @ wq.T).reshape(B, L, n_heads, d_k).transpose(0, 2, 1, 3)
    K = (k @ wk.T).reshape(B, L, n_heads, d_k).transpose(0, 2, 1, 3)
    V = (v @ wv.T).reshape(B, L, n_heads, d_v).transpose(0, 2, 1, 3)
    scores = jnp.einsum('bhld,bhmd->bhlm', Q, K) / (d_k ** 0.5)
    attn = jax.nn.softmax(scores, axis=-1)
    ctx = jnp.einsum('bhlm,bhmd->bhld', attn, V)
    ctx = ctx.transpose(0, 2, 1, 3).reshape(B, L, n_heads * d_v)
    out = ctx @ wo.T + residual
    mu = out.mean(-1, keepdims=True)
    var = ((out - mu) ** 2).mean(-1, keepdims=True)
    out = (out - mu) / jnp.sqrt(var + ln_eps) * gamma[0] + beta[0]
    return out, attn


if __name__ == "__main__":
    # Small shapes consistent with the module: d_k == d_v == d_model / n_heads
    B, L, d_model, n_heads = 2, 8, 32, 4
    d_k = d_v = d_model // n_heads  # 8

    key = jax.random.PRNGKey(0)
    kq, kk, kv, kp = jax.random.split(key, 4)
    q = jax.random.normal(kq, (B, L, d_model), jnp.float32)
    k = jax.random.normal(kk, (B, L, d_model), jnp.float32)
    v = jax.random.normal(kv, (B, L, d_model), jnp.float32)
    params = init_params(kp, d_model, d_k, d_v, n_heads)

    ref_out, ref_attn = reference_mha(q, k, v, params,
                                      n_heads=n_heads, d_k=d_k, d_v=d_v)

    # bf16 MXU operands (default fast path) — looser tolerance.
    out, attn = multi_head_attention(q, k, v, params, n_heads=n_heads,
                                     d_k=d_k, d_v=d_v,
                                     compute_dtype=jnp.bfloat16)
    out = jax.block_until_ready(out)
    attn = jax.block_until_ready(attn)
    assert jnp.allclose(out, ref_out, atol=5e-2, rtol=5e-2), "bf16 output mismatch"
    assert jnp.allclose(attn, ref_attn, atol=2e-2, rtol=2e-2), "bf16 attn mismatch"

    # f32 operands — tight check of the kernel math / structure.
    out32, attn32 = multi_head_attention(q, k, v, params, n_heads=n_heads,
                                         d_k=d_k, d_v=d_v,
                                         compute_dtype=jnp.float32)
    out32 = jax.block_until_ready(out32)
    attn32 = jax.block_until_ready(attn32)
    assert jnp.allclose(out32, ref_out, atol=5e-3, rtol=5e-3), "f32 output mismatch"
    assert jnp.allclose(attn32, ref_attn, atol=5e-3, rtol=5e-3), "f32 attn mismatch"

    print("KERNEL_OK")
</pallas_src>

<mosaic_0001>
module attributes {stable_mosaic.version = 11 : i64} {
  func.func @mha_kernel(%arg0: i32, %arg1: i32, %arg2: memref<1x8x32xf32, #tpu.memory_space<vmem>>, %arg3: memref<1x8x32xf32, #tpu.memory_space<vmem>>, %arg4: memref<1x8x32xf32, #tpu.memory_space<vmem>>, %arg5: memref<32x32xbf16, #tpu.memory_space<vmem>>, %arg6: memref<32x32xbf16, #tpu.memory_space<vmem>>, %arg7: memref<32x32xbf16, #tpu.memory_space<vmem>>, %arg8: memref<32x32xbf16, #tpu.memory_space<vmem>>, %arg9: memref<1x32xf32, #tpu.memory_space<vmem>>, %arg10: memref<1x32xf32, #tpu.memory_space<vmem>>, %arg11: memref<1x8x32xf32, #tpu.memory_space<vmem>>, %arg12: memref<1x4x8x8xf32, #tpu.memory_space<vmem>>, %arg13: memref<8x32xbf16, #tpu.memory_space<vmem>>, %arg14: memref<8x32xbf16, #tpu.memory_space<vmem>>) attributes {dimension_semantics = [#tpu.dimension_semantics<parallel>, #tpu.dimension_semantics<arbitrary>], iteration_bounds = array<i64: 2, 1>, scalar_prefetch = 0 : i64, scratch_operands = 2 : i64, tpu.core_type = #tpu.core_type<tc>, window_params = [{transform_indices = @transform_0, window_bounds = array<i64: 1, 8, 32>}, {transform_indices = @transform_1, window_bounds = array<i64: 1, 8, 32>}, {transform_indices = @transform_2, window_bounds = array<i64: 1, 8, 32>}, {pipeline_mode = #tpu.pipeline_mode<synchronous>, transform_indices = @transform_3, window_bounds = array<i64: 32, 32>}, {pipeline_mode = #tpu.pipeline_mode<synchronous>, transform_indices = @transform_4, window_bounds = array<i64: 32, 32>}, {pipeline_mode = #tpu.pipeline_mode<synchronous>, transform_indices = @transform_5, window_bounds = array<i64: 32, 32>}, {pipeline_mode = #tpu.pipeline_mode<synchronous>, transform_indices = @transform_6, window_bounds = array<i64: 32, 32>}, {pipeline_mode = #tpu.pipeline_mode<synchronous>, transform_indices = @transform_7, window_bounds = array<i64: 1, 32>}, {pipeline_mode = #tpu.pipeline_mode<synchronous>, transform_indices = @transform_8, window_bounds = array<i64: 1, 32>}, {transform_indices = @transform_9, window_bounds = array<i64: 1, 8, 32>}, {transform_indices = @transform_10, window_bounds = array<i64: 1, 4, 8, 8>}]} {
    %c0_i32 = arith.constant 0 : i32
    %0 = arith.cmpi eq, %arg1, %c0_i32 : i32
    %1 = arith.extui %0 : i1 to i32
    %c0_i32_0 = arith.constant 0 : i32
    %2 = arith.cmpi ne, %1, %c0_i32_0 : i32
    scf.if %2 {
      %c0_53 = arith.constant 0 : index
      %c0_54 = arith.constant 0 : index
      %c0_55 = arith.constant 0 : index
      %123 = vector.load %arg3[%c0_53, %c0_54, %c0_55] : memref<1x8x32xf32, #tpu.memory_space<vmem>>, vector<1x8x32xf32>
      %124 = vector.shape_cast %123 : vector<1x8x32xf32> to vector<8x32xf32>
      %125 = arith.truncf %124 : vector<8x32xf32> to vector<8x32xbf16>
      %c0_56 = arith.constant 0 : index
      %c0_57 = arith.constant 0 : index
      %c0_58 = arith.constant 0 : index
      %126 = vector.load %arg4[%c0_56, %c0_57, %c0_58] : memref<1x8x32xf32, #tpu.memory_space<vmem>>, vector<1x8x32xf32>
      %127 = vector.shape_cast %126 : vector<1x8x32xf32> to vector<8x32xf32>
      %128 = arith.truncf %127 : vector<8x32xf32> to vector<8x32xbf16>
      %c0_59 = arith.constant 0 : index
      %c0_60 = arith.constant 0 : index
      %129 = vector.load %arg6[%c0_59, %c0_60] : memref<32x32xbf16, #tpu.memory_space<vmem>>, vector<32x32xbf16>
      %cst_61 = arith.constant dense<0.000000e+00> : vector<8x32xf32>
      %130 = tpu.matmul %125, %129, %cst_61 {dimension_numbers = #tpu.dot_dimension_numbers<[1], [0], [0], [1], [0, 0, 1, 1], [], []>} : vector<8x32xbf16>, vector<32x32xbf16>, vector<8x32xf32> -> vector<8x32xf32>
      %131 = arith.truncf %130 : vector<8x32xf32> to vector<8x32xbf16>
      %c0_62 = arith.constant 0 : index
      %c0_63 = arith.constant 0 : index
      %132 = vector.load %arg13[%c0_62, %c0_63] : memref<8x32xbf16, #tpu.memory_space<vmem>>, vector<8x32xbf16>
      tpu.vector_store %arg13[%c0_62, %c0_63], %131 {strides = array<i32>} : memref<8x32xbf16, #tpu.memory_space<vmem>>, vector<8x32xbf16>,
      %c0_64 = arith.constant 0 : index
      %c0_65 = arith.constant 0 : index
      %133 = vector.load %arg7[%c0_64, %c0_65] : memref<32x32xbf16, #tpu.memory_space<vmem>>, vector<32x32xbf16>
      %cst_66 = arith.constant dense<0.000000e+00> : vector<8x32xf32>
      %134 = tpu.matmul %128, %133, %cst_66 {dimension_numbers = #tpu.dot_dimension_numbers<[1], [0], [0], [1], [0, 0, 1, 1], [], []>} : vector<8x32xbf16>, vector<32x32xbf16>, vector<8x32xf32> -> vector<8x32xf32>
      %135 = arith.truncf %134 : vector<8x32xf32> to vector<8x32xbf16>
      %c0_67 = arith.constant 0 : index
      %c0_68 = arith.constant 0 : index
      %136 = vector.load %arg14[%c0_67, %c0_68] : memref<8x32xbf16, #tpu.memory_space<vmem>>, vector<8x32xbf16>
      tpu.vector_store %arg14[%c0_67, %c0_68], %135 {strides = array<i32>} : memref<8x32xbf16, #tpu.memory_space<vmem>>, vector<8x32xbf16>,
    } else {
    }
    %c0 = arith.constant 0 : index
    %c0_1 = arith.constant 0 : index
    %c0_2 = arith.constant 0 : index
    %3 = vector.load %arg2[%c0, %c0_1, %c0_2] : memref<1x8x32xf32, #tpu.memory_space<vmem>>, vector<1x8x32xf32>
    %4 = vector.shape_cast %3 : vector<1x8x32xf32> to vector<8x32xf32>
    %5 = arith.truncf %4 : vector<8x32xf32> to vector<8x32xbf16>
    %c0_3 = arith.constant 0 : index
    %c0_4 = arith.constant 0 : index
    %6 = vector.load %arg5[%c0_3, %c0_4] : memref<32x32xbf16, #tpu.memory_space<vmem>>, vector<32x32xbf16>
    %cst = arith.constant dense<0.000000e+00> : vector<8x32xf32>
    %7 = tpu.matmul %5, %6, %cst {dimension_numbers = #tpu.dot_dimension_numbers<[1], [0], [0], [1], [0, 0, 1, 1], [], []>} : vector<8x32xbf16>, vector<32x32xbf16>, vector<8x32xf32> -> vector<8x32xf32>
    %8 = arith.truncf %7 : vector<8x32xf32> to vector<8x32xbf16>
    %c0_5 = arith.constant 0 : index
    %c0_6 = arith.constant 0 : index
    %9 = vector.load %arg13[%c0_5, %c0_6] : memref<8x32xbf16, #tpu.memory_space<vmem>>, vector<8x32xbf16>
    %c0_7 = arith.constant 0 : index
    %c0_8 = arith.constant 0 : index
    %10 = vector.load %arg14[%c0_7, %c0_8] : memref<8x32xbf16, #tpu.memory_space<vmem>>, vector<8x32xbf16>
    %11 = vector.extract_strided_slice %8 {offsets = [0, 0], sizes = [8, 8], strides = [1, 1]} : vector<8x32xbf16> to vector<8x8xbf16>
    %12 = vector.extract_strided_slice %9 {offsets = [0, 0], sizes = [8, 8], strides = [1, 1]} : vector<8x32xbf16> to vector<8x8xbf16>
    %13 = vector.extract_strided_slice %10 {offsets = [0, 0], sizes = [8, 8], strides = [1, 1]} : vector<8x32xbf16> to vector<8x8xbf16>
    %cst_9 = arith.constant dense<0.000000e+00> : vector<8x8xf32>
    %14 = tpu.matmul %11, %12, %cst_9 {dimension_numbers = #tpu.dot_dimension_numbers<[1], [1], [0], [0], [0, 0, 1, 0], [], []>} : vector<8x8xbf16>, vector<8x8xbf16>, vector<8x8xf32> -> vector<8x8xf32>
    %cst_10 = arith.constant dense<0xFF800000> : vector<8xf32>
    %15 = vector.multi_reduction <maximumf>, %14, %cst_10 [1] : vector<8x8xf32> to vector<8xf32>
    %16 = vector.shape_cast %15 : vector<8xf32> to vector<8x1xf32>
    %17 = vector.broadcast %16 : vector<8x1xf32> to vector<8x8xf32>
    %18 = arith.subf %14, %17 : vector<8x8xf32>
    %19 = math.exp %18 : vector<8x8xf32>
    %cst_11 = arith.constant dense<0.000000e+00> : vector<8xf32>
    %20 = vector.multi_reduction <add>, %19, %cst_11 [1] : vector<8x8xf32> to vector<8xf32>
    %21 = vector.shape_cast %20 : vector<8xf32> to vector<8x1xf32>
    %22 = tpu.reciprocal %21 {approx = true} : vector<8x1xf32> -> vector<8x1xf32>
    %23 = vector.broadcast %22 : vector<8x1xf32> to vector<8x8xf32>
    %24 = arith.mulf %19, %23 : vector<8x8xf32>
    %c0_12 = arith.constant 0 : index
    %c0_13 = arith.constant 0 : index
    %c0_14 = arith.constant 0 : index
    %c0_15 = arith.constant 0 : index
    %25 = vector.load %arg12[%c0_12, %c0_13, %c0_14, %c0_15] : memref<1x4x8x8xf32, #tpu.memory_space<vmem>>, vector<1x1x8x8xf32>
    %26 = vector.shape_cast %25 : vector<1x1x8x8xf32> to vector<8x8xf32>
    %27 = vector.shape_cast %24 : vector<8x8xf32> to vector<1x1x8x8xf32>
    tpu.vector_store %arg12[%c0_12, %c0_13, %c0_14, %c0_15], %27 {strides = array<i32>} : memref<1x4x8x8xf32, #tpu.memory_space<vmem>>, vector<1x1x8x8xf32>,
    %28 = arith.truncf %24 : vector<8x8xf32> to vector<8x8xbf16>
    %cst_16 = arith.constant dense<0.000000e+00> : vector<8x8xf32>
    %29 = tpu.matmul %28, %13, %cst_16 {dimension_numbers = #tpu.dot_dimension_numbers<[1], [0], [0], [1], [0, 0, 1, 1], [], []>} : vector<8x8xbf16>, vector<8x8xbf16>, vector<8x8xf32> -> vector<8x8xf32>
    %30 = vector.extract_strided_slice %8 {offsets = [0, 8], sizes = [8, 8], strides = [1, 1]} : vector<8x32xbf16> to vector<8x8xbf16>
    %31 = vector.extract_strided_slice %9 {offsets = [0, 8], sizes = [8, 8], strides = [1, 1]} : vector<8x32xbf16> to vector<8x8xbf16>
    %32 = vector.extract_strided_slice %10 {offsets = [0, 8], sizes = [8, 8], strides = [1, 1]} : vector<8x32xbf16> to vector<8x8xbf16>
    %cst_17 = arith.constant dense<0.000000e+00> : vector<8x8xf32>
    %33 = tpu.matmul %30, %31, %cst_17 {dimension_numbers = #tpu.dot_dimension_numbers<[1], [1], [0], [0], [0, 0, 1, 0], [], []>} : vector<8x8xbf16>, vector<8x8xbf16>, vector<8x8xf32> -> vector<8x8xf32>
    %cst_18 = arith.constant dense<0xFF800000> : vector<8xf32>
    %34 = vector.multi_reduction <maximumf>, %33, %cst_18 [1] : vector<8x8xf32> to vector<8xf32>
    %35 = vector.shape_cast %34 : vector<8xf32> to vector<8x1xf32>
    %36 = vector.broadcast %35 : vector<8x1xf32> to vector<8x8xf32>
    %37 = arith.subf %33, %36 : vector<8x8xf32>
    %38 = math.exp %37 : vector<8x8xf32>
    %cst_19 = arith.constant dense<0.000000e+00> : vector<8xf32>
    %39 = vector.multi_reduction <add>, %38, %cst_19 [1] : vector<8x8xf32> to vector<8xf32>
    %40 = vector.shape_cast %39 : vector<8xf32> to vector<8x1xf32>
    %41 = tpu.reciprocal %40 {approx = true} : vector<8x1xf32> -> vector<8x1xf32>
    %42 = vector.broadcast %41 : vector<8x1xf32> to vector<8x8xf32>
    %43 = arith.mulf %38, %42 : vector<8x8xf32>
    %c0_20 = arith.constant 0 : index
    %c1 = arith.constant 1 : index
    %c0_21 = arith.constant 0 : index
    %c0_22 = arith.constant 0 : index
    %44 = vector.load %arg12[%c0_20, %c1, %c0_21, %c0_22] : memref<1x4x8x8xf32, #tpu.memory_space<vmem>>, vector<1x1x8x8xf32>
    %45 = vector.shape_cast %44 : vector<1x1x8x8xf32> to vector<8x8xf32>
    %46 = vector.shape_cast %43 : vector<8x8xf32> to vector<1x1x8x8xf32>
    tpu.vector_store %arg12[%c0_20, %c1, %c0_21, %c0_22], %46 {strides = array<i32>} : memref<1x4x8x8xf32, #tpu.memory_space<vmem>>, vector<1x1x8x8xf32>,
    %47 = arith.truncf %43 : vector<8x8xf32> to vector<8x8xbf16>
    %cst_23 = arith.constant dense<0.000000e+00> : vector<8x8xf32>
    %48 = tpu.matmul %47, %32, %cst_23 {dimension_numbers = #tpu.dot_dimension_numbers<[1], [0], [0], [1], [0, 0, 1, 1], [], []>} : vector<8x8xbf16>, vector<8x8xbf16>, vector<8x8xf32> -> vector<8x8xf32>
    %49 = vector.extract_strided_slice %8 {offsets = [0, 16], sizes = [8, 8], strides = [1, 1]} : vector<8x32xbf16> to vector<8x8xbf16>
    %50 = vector.extract_strided_slice %9 {offsets = [0, 16], sizes = [8, 8], strides = [1, 1]} : vector<8x32xbf16> to vector<8x8xbf16>
    %51 = vector.extract_strided_slice %10 {offsets = [0, 16], sizes = [8, 8], strides = [1, 1]} : vector<8x32xbf16> to vector<8x8xbf16>
    %cst_24 = arith.constant dense<0.000000e+00> : vector<8x8xf32>
    %52 = tpu.matmul %49, %50, %cst_24 {dimension_numbers = #tpu.dot_dimension_numbers<[1], [1], [0], [0], [0, 0, 1, 0], [], []>} : vector<8x8xbf16>, vector<8x8xbf16>, vector<8x8xf32> -> vector<8x8xf32>
    %cst_25 = arith.constant dense<0xFF800000> : vector<8xf32>
    %53 = vector.multi_reduction <maximumf>, %52, %cst_25 [1] : vector<8x8xf32> to vector<8xf32>
    %54 = vector.shape_cast %53 : vector<8xf32> to vector<8x1xf32>
    %55 = vector.broadcast %54 : vector<8x1xf32> to vector<8x8xf32>
    %56 = arith.subf %52, %55 : vector<8x8xf32>
    %57 = math.exp %56 : vector<8x8xf32>
    %cst_26 = arith.constant dense<0.000000e+00> : vector<8xf32>
    %58 = vector.multi_reduction <add>, %57, %cst_26 [1] : vector<8x8xf32> to vector<8xf32>
    %59 = vector.shape_cast %58 : vector<8xf32> to vector<8x1xf32>
    %60 = tpu.reciprocal %59 {approx = true} : vector<8x1xf32> -> vector<8x1xf32>
    %61 = vector.broadcast %60 : vector<8x1xf32> to vector<8x8xf32>
    %62 = arith.mulf %57, %61 : vector<8x8xf32>
    %c0_27 = arith.constant 0 : index
    %c2 = arith.constant 2 : index
    %c0_28 = arith.constant 0 : index
    %c0_29 = arith.constant 0 : index
    %63 = vector.load %arg12[%c0_27, %c2, %c0_28, %c0_29] : memref<1x4x8x8xf32, #tpu.memory_space<vmem>>, vector<1x1x8x8xf32>
    %64 = vector.shape_cast %63 : vector<1x1x8x8xf32> to vector<8x8xf32>
    %65 = vector.shape_cast %62 : vector<8x8xf32> to vector<1x1x8x8xf32>
    tpu.vector_store %arg12[%c0_27, %c2, %c0_28, %c0_29], %65 {strides = array<i32>} : memref<1x4x8x8xf32, #tpu.memory_space<vmem>>, vector<1x1x8x8xf32>,
    %66 = arith.truncf %62 : vector<8x8xf32> to vector<8x8xbf16>
    %cst_30 = arith.constant dense<0.000000e+00> : vector<8x8xf32>
    %67 = tpu.matmul %66, %51, %cst_30 {dimension_numbers = #tpu.dot_dimension_numbers<[1], [0], [0], [1], [0, 0, 1, 1], [], []>} : vector<8x8xbf16>, vector<8x8xbf16>, vector<8x8xf32> -> vector<8x8xf32>
    %68 = vector.extract_strided_slice %8 {offsets = [0, 24], sizes = [8, 8], strides = [1, 1]} : vector<8x32xbf16> to vector<8x8xbf16>
    %69 = vector.extract_strided_slice %9 {offsets = [0, 24], sizes = [8, 8], strides = [1, 1]} : vector<8x32xbf16> to vector<8x8xbf16>
    %70 = vector.extract_strided_slice %10 {offsets = [0, 24], sizes = [8, 8], strides = [1, 1]} : vector<8x32xbf16> to vector<8x8xbf16>
    %cst_31 = arith.constant dense<0.000000e+00> : vector<8x8xf32>
    %71 = tpu.matmul %68, %69, %cst_31 {dimension_numbers = #tpu.dot_dimension_numbers<[1], [1], [0], [0], [0, 0, 1, 0], [], []>} : vector<8x8xbf16>, vector<8x8xbf16>, vector<8x8xf32> -> vector<8x8xf32>
    %cst_32 = arith.constant dense<0xFF800000> : vector<8xf32>
    %72 = vector.multi_reduction <maximumf>, %71, %cst_32 [1] : vector<8x8xf32> to vector<8xf32>
    %73 = vector.shape_cast %72 : vector<8xf32> to vector<8x1xf32>
    %74 = vector.broadcast %73 : vector<8x1xf32> to vector<8x8xf32>
    %75 = arith.subf %71, %74 : vector<8x8xf32>
    %76 = math.exp %75 : vector<8x8xf32>
    %cst_33 = arith.constant dense<0.000000e+00> : vector<8xf32>
    %77 = vector.multi_reduction <add>, %76, %cst_33 [1] : vector<8x8xf32> to vector<8xf32>
    %78 = vector.shape_cast %77 : vector<8xf32> to vector<8x1xf32>
    %79 = tpu.reciprocal %78 {approx = true} : vector<8x1xf32> -> vector<8x1xf32>
    %80 = vector.broadcast %79 : vector<8x1xf32> to vector<8x8xf32>
    %81 = arith.mulf %76, %80 : vector<8x8xf32>
    %c0_34 = arith.constant 0 : index
    %c3 = arith.constant 3 : index
    %c0_35 = arith.constant 0 : index
    %c0_36 = arith.constant 0 : index
    %82 = vector.load %arg12[%c0_34, %c3, %c0_35, %c0_36] : memref<1x4x8x8xf32, #tpu.memory_space<vmem>>, vector<1x1x8x8xf32>
    %83 = vector.shape_cast %82 : vector<1x1x8x8xf32> to vector<8x8xf32>
    %84 = vector.shape_cast %81 : vector<8x8xf32> to vector<1x1x8x8xf32>
    tpu.vector_store %arg12[%c0_34, %c3, %c0_35, %c0_36], %84 {strides = array<i32>} : memref<1x4x8x8xf32, #tpu.memory_space<vmem>>, vector<1x1x8x8xf32>,
    %85 = arith.truncf %81 : vector<8x8xf32> to vector<8x8xbf16>
    %cst_37 = arith.constant dense<0.000000e+00> : vector<8x8xf32>
    %86 = tpu.matmul %85, %70, %cst_37 {dimension_numbers = #tpu.dot_dimension_numbers<[1], [0], [0], [1], [0, 0, 1, 1], [], []>} : vector<8x8xbf16>, vector<8x8xbf16>, vector<8x8xf32> -> vector<8x8xf32>
    %87 = tpu.concatenate %29, %48, %67, %86 in 1 : vector<8x8xf32>, vector<8x8xf32>, vector<8x8xf32>, vector<8x8xf32> -> vector<8x32xf32>
    %88 = arith.truncf %87 : vector<8x32xf32> to vector<8x32xbf16>
    %c0_38 = arith.constant 0 : index
    %c0_39 = arith.constant 0 : index
    %89 = vector.load %arg8[%c0_38, %c0_39] : memref<32x32xbf16, #tpu.memory_space<vmem>>, vector<32x32xbf16>
    %cst_40 = arith.constant dense<0.000000e+00> : vector<8x32xf32>
    %90 = tpu.matmul %88, %89, %cst_40 {dimension_numbers = #tpu.dot_dimension_numbers<[1], [0], [0], [1], [0, 0, 1, 1], [], []>} : vector<8x32xbf16>, vector<32x32xbf16>, vector<8x32xf32> -> vector<8x32xf32>
    %91 = arith.addf %90, %4 : vector<8x32xf32>
    %cst_41 = arith.constant dense<0.000000e+00> : vector<8xf32>
    %92 = vector.multi_reduction <add>, %91, %cst_41 [1] : vector<8x32xf32> to vector<8xf32>
    %93 = vector.shape_cast %92 : vector<8xf32> to vector<8x1xf32>
    %cst_42 = arith.constant 3.200000e+01 : f32
    %94 = vector.broadcast %cst_42 : f32 to vector<8x1xf32>
    %95 = arith.divf %93, %94 : vector<8x1xf32>
    %96 = vector.broadcast %95 : vector<8x1xf32> to vector<8x32xf32>
    %97 = arith.subf %91, %96 : vector<8x32xf32>
    %98 = arith.mulf %97, %97 : vector<8x32xf32>
    %cst_43 = arith.constant dense<0.000000e+00> : vector<8xf32>
    %99 = vector.multi_reduction <add>, %98, %cst_43 [1] : vector<8x32xf32> to vector<8xf32>
    %100 = vector.shape_cast %99 : vector<8xf32> to vector<8x1xf32>
    %cst_44 = arith.constant 3.200000e+01 : f32
    %101 = vector.broadcast %cst_44 : f32 to vector<8x1xf32>
    %102 = arith.divf %100, %101 : vector<8x1xf32>
    %103 = vector.broadcast %95 : vector<8x1xf32> to vector<8x32xf32>
    %104 = arith.subf %91, %103 : vector<8x32xf32>
    %cst_45 = arith.constant 9.99999997E-7 : f32
    %105 = vector.broadcast %cst_45 : f32 to vector<8x1xf32>
    %106 = arith.addf %102, %105 : vector<8x1xf32>
    %107 = math.rsqrt %106 : vector<8x1xf32>
    %108 = vector.broadcast %107 : vector<8x1xf32> to vector<8x32xf32>
    %109 = arith.mulf %104, %108 : vector<8x32xf32>
    %c0_46 = arith.constant 0 : index
    %c0_47 = arith.constant 0 : index
    %110 = vector.load %arg9[%c0_46, %c0_47] : memref<1x32xf32, #tpu.memory_space<vmem>>, vector<1x32xf32>
    %111 = vector.shape_cast %110 : vector<1x32xf32> to vector<32xf32>
    %112 = vector.shape_cast %111 : vector<32xf32> to vector<1x32xf32>
    %113 = vector.broadcast %112 : vector<1x32xf32> to vector<8x32xf32>
    %114 = arith.mulf %109, %113 : vector<8x32xf32>
    %c0_48 = arith.constant 0 : index
    %c0_49 = arith.constant 0 : index
    %115 = vector.load %arg10[%c0_48, %c0_49] : memref<1x32xf32, #tpu.memory_space<vmem>>, vector<1x32xf32>
    %116 = vector.shape_cast %115 : vector<1x32xf32> to vector<32xf32>
    %117 = vector.shape_cast %116 : vector<32xf32> to vector<1x32xf32>
    %118 = vector.broadcast %117 : vector<1x32xf32> to vector<8x32xf32>
    %119 = arith.addf %114, %118 : vector<8x32xf32>
    %c0_50 = arith.constant 0 : index
    %c0_51 = arith.constant 0 : index
    %c0_52 = arith.constant 0 : index
    %120 = vector.load %arg11[%c0_50, %c0_51, %c0_52] : memref<1x8x32xf32, #tpu.memory_space<vmem>>, vector<1x8x32xf32>
    %121 = vector.shape_cast %120 : vector<1x8x32xf32> to vector<8x32xf32>
    %122 = vector.shape_cast %119 : vector<8x32xf32> to vector<1x8x32xf32>
    tpu.vector_store %arg11[%c0_50, %c0_51, %c0_52], %122 {strides = array<i32>} : memref<1x8x32xf32, #tpu.memory_space<vmem>>, vector<1x8x32xf32>,
    return
  }
  func.func @transform_0(%arg0: i32, %arg1: i32) -> (i32, i32, i32) {
    %c0_i32 = arith.constant 0 : i32
    %c0_i32_0 = arith.constant 0 : i32
    return %arg0, %arg1, %c0_i32 : i32, i32, i32
  }
  func.func @transform_1(%arg0: i32, %arg1: i32) -> (i32, i32, i32) {
    %c0_i32 = arith.constant 0 : i32
    %c0_i32_0 = arith.constant 0 : i32
    %c0_i32_1 = arith.constant 0 : i32
    return %arg0, %c0_i32, %c0_i32_0 : i32, i32, i32
  }
  func.func @transform_2(%arg0: i32, %arg1: i32) -> (i32, i32, i32) {
    %c0_i32 = arith.constant 0 : i32
    %c0_i32_0 = arith.constant 0 : i32
    %c0_i32_1 = arith.constant 0 : i32
    return %arg0, %c0_i32, %c0_i32_0 : i32, i32, i32
  }
  func.func @transform_3(%arg0: i32, %arg1: i32) -> (i32, i32) {
    %c0_i32 = arith.constant 0 : i32
    %c0_i32_0 = arith.constant 0 : i32
    %c0_i32_1 = arith.constant 0 : i32
    return %c0_i32, %c0_i32_0 : i32, i32
  }
  func.func @transform_4(%arg0: i32, %arg1: i32) -> (i32, i32) {
    %c0_i32 = arith.constant 0 : i32
    %c0_i32_0 = arith.constant 0 : i32
    %c0_i32_1 = arith.constant 0 : i32
    return %c0_i32, %c0_i32_0 : i32, i32
  }
  func.func @transform_5(%arg0: i32, %arg1: i32) -> (i32, i32) {
    %c0_i32 = arith.constant 0 : i32
    %c0_i32_0 = arith.constant 0 : i32
    %c0_i32_1 = arith.constant 0 : i32
    return %c0_i32, %c0_i32_0 : i32, i32
  }
  func.func @transform_6(%arg0: i32, %arg1: i32) -> (i32, i32) {
    %c0_i32 = arith.constant 0 : i32
    %c0_i32_0 = arith.constant 0 : i32
    %c0_i32_1 = arith.constant 0 : i32
    return %c0_i32, %c0_i32_0 : i32, i32
  }
  func.func @transform_7(%arg0: i32, %arg1: i32) -> (i32, i32) {
    %c0_i32 = arith.constant 0 : i32
    %c0_i32_0 = arith.constant 0 : i32
    %c0_i32_1 = arith.constant 0 : i32
    return %c0_i32, %c0_i32_0 : i32, i32
  }
  func.func @transform_8(%arg0: i32, %arg1: i32) -> (i32, i32) {
    %c0_i32 = arith.constant 0 : i32
    %c0_i32_0 = arith.constant 0 : i32
    %c0_i32_1 = arith.constant 0 : i32
    return %c0_i32, %c0_i32_0 : i32, i32
  }
  func.func @transform_9(%arg0: i32, %arg1: i32) -> (i32, i32, i32) {
    %c0_i32 = arith.constant 0 : i32
    %c0_i32_0 = arith.constant 0 : i32
    return %arg0, %arg1, %c0_i32 : i32, i32, i32
  }
  func.func @transform_10(%arg0: i32, %arg1: i32) -> (i32, i32, i32, i32) {
    %c0_i32 = arith.constant 0 : i32
    %c0_i32_0 = arith.constant 0 : i32
    %c0_i32_1 = arith.constant 0 : i32
    return %arg0, %c0_i32, %arg1, %c0_i32_0 : i32, i32, i32, i32
  }
}

</mosaic_0001>

<llo_original>
// kernel: tpu_custom_call.1
$region0: #{tpu_custom_call.1}
  #allocation0 [shape = 'u32[]', space=smem, size = 0x4, offset = 0x4, fixed_abs, tag = 'smem constant byte address 0x4 - core index']
  #allocation1 [shape = 'u32[144,128]{1,0:T(1,128)}', space=vmem, size = 0x12000, scoped, tag = 'internal scratch']
  #allocation2 [shape = 'bf16[8,32]{1,0:T(8,128)(2,1)}', space=vmem, size = 0x800, scoped, tag = 'scratch operand']
  #allocation3 [shape = 'bf16[8,32]{1,0:T(8,128)(2,1)}', space=vmem, size = 0x800, scoped, tag = 'scratch operand']
  %s0 = inlined_call_operand.hbm [shape: f32[2,8,32], index: 0, kind: input, shape index: {}]
  %s1 = inlined_call_operand.hbm [shape: f32[2,8,32], index: 1, kind: input, shape index: {}]
  %s2 = inlined_call_operand.hbm [shape: f32[2,8,32], index: 2, kind: input, shape index: {}]
  %s3 = inlined_call_operand.hbm [shape: bf16[32,32], index: 3, kind: input, shape index: {}]
  %s4 = inlined_call_operand.hbm [shape: bf16[32,32], index: 4, kind: input, shape index: {}]
  %s5 = inlined_call_operand.vmem [shape: bf16[32,32], index: 5, kind: input, shape index: {}]
  %s6 = inlined_call_operand.hbm [shape: bf16[32,32], index: 6, kind: input, shape index: {}]
  %s7 = inlined_call_operand.vmem [shape: f32[1,32], index: 7, kind: input, shape index: {}]
  %s8 = inlined_call_operand.vmem [shape: f32[1,32], index: 8, kind: input, shape index: {}]
  %s9 = inlined_call_operand.hbm [shape: f32[2,8,32], index: 9, kind: output, shape index: {0}]
  %s10 = inlined_call_operand.hbm [shape: f32[2,4,8,8], index: 10, kind: output, shape index: {1}]
  %11 = xla_tuple %s9, %s10
  %s12 = sld [smem:[#allocation0]]
  $region105: #{tpu_custom_call.1} parent=0
    _
  %s14 = ssub.s32 1, %s12
  %s15 = scalar_select 0, %s14, %s12
  $region1: #{tpu_custom_call.1} parent=0
    #allocation4 [shape = 'u8[8192]{0}', space=vmem, size = 0x2000, scoped, tag = 'input window, operand 0']
    #allocation5 [shape = 's32[2]{0}', space=sflag, size = 0x8, scoped, tag = 'scoped memory for tpu_custom_call.1']
    #allocation6 [shape = 's32[2]{0}', space=sflag, size = 0x8, scoped, tag = 'scoped memory for tpu_custom_call.1']
    #allocation7 [shape = 'u8[8192]{0}', space=vmem, size = 0x2000, scoped, tag = 'input window, operand 1']
    #allocation8 [shape = 's32[2]{0}', space=sflag, size = 0x8, scoped, tag = 'scoped memory for tpu_custom_call.1']
    #allocation9 [shape = 'u8[8192]{0}', space=vmem, size = 0x2000, scoped, tag = 'input window, operand 2']
    #allocation10 [shape = 'u8[8192]{0}', space=vmem, size = 0x2000, scoped, tag = 'input window, operand 3, single buffered']
    #allocation11 [shape = 's32[1]{0}', space=sflag, size = 0x4, scoped, tag = 'scoped memory for tpu_custom_call.1']
    #allocation12 [shape = 'u8[8192]{0}', space=vmem, size = 0x2000, scoped, tag = 'input window, operand 4, single buffered']
    #allocation13 [shape = 'u8[8192]{0}', space=vmem, size = 0x2000, scoped, tag = 'input window, operand 6, single buffered']
    #allocation14 [shape = 's32[1]{0}', space=sflag, size = 0x4, scoped, tag = 'scoped memory for tpu_custom_call.1']
    #allocation15 [shape = 'u8[8192]{0}', space=vmem, size = 0x2000, scoped, tag = 'output window, operand 0']
    #allocation16 [shape = 'u8[32768]{0}', space=vmem, size = 0x8000, scoped, tag = 'output window, operand 1']
    #allocation17 [shape = 's32[2]{0}', space=sflag, size = 0x8, scoped, tag = 'scoped memory for tpu_custom_call.1']
    %16 = vsyncpa [#allocation5], 0
    %s17 = scalar_lea.sflag [#allocation5], 1
    %18 = vsyncpa %s17, 0
    %19 = vsyncpa [#allocation8], 0
    %s20 = scalar_lea.sflag [#allocation8], 1
    %21 = vsyncpa %s20, 0
    %22 = vsyncpa [#allocation11], 0
    %23 = vsyncpa [#allocation14], 0
    %24 = vsyncpa [#allocation6], 0
    %s25 = scalar_lea.sflag [#allocation6], 1
    %26 = vsyncpa %s25, 0
    %27 = vsyncpa [#allocation17], 0
    %s28 = scalar_lea.sflag [#allocation17], 1
    %29 = vsyncpa %s28, 0
    loop: start=0, step=1, limit=4
    $region2: #{tpu_custom_call.1} parent=1 // loop_pre_header
      _
    $region3: #{tpu_custom_call.1} parent=1 // loop_header
      %s31 = sphi 0, %s35
      %p32 = scmp.ge.s32.totalorder %s31, 4
      %s38 = sphi 0, %s50
      %s39 = sphi 0, %s46
      %s40 = sphi 0, %s38
      %s41 = sphi 0, %s39
      %s42 = sphi 0, %s40
      %s43 = sphi 0, %s41
      %s55 = sphi 0, %s57
      %s58 = sphi 0, %s55
      %s59 = sphi 0, %s58
      %s75 = sphi 0, %s59
      %s81 = sphi 0, %s83
      %s84 = sphi 0, %s81
      %s85 = sphi 0, %s84
      %s101 = sphi 0, %s85
      %s107 = sphi 0, %s109
      %s110 = sphi 0, %s107
      %s111 = sphi 0, %s110
      %s127 = sphi 0, %s111
      %s131 = sphi 0, %s131
      %s133 = sphi 0, %s131
      %s134 = sphi 0, %s133
      %s148 = sphi 0, %s134
      %s152 = sphi 0, %s152
      %s154 = sphi 0, %s152
      %s155 = sphi 0, %s154
      %s169 = sphi 0, %s155
      %s173 = sphi 0, %s173
      %s175 = sphi 0, %s173
      %s176 = sphi 0, %s175
      %s190 = sphi 0, %s176
      %s194 = sphi 0, %s194
      %s196 = sphi 0, %s194
      %s197 = sphi 0, %s196
      %s211 = sphi 0, %s197
      %s215 = sphi 0, %s215
      %s217 = sphi 0, %s215
      %s218 = sphi 0, %s217
      %s232 = sphi 0, %s218
      %s236 = sphi 0, %s236
      %s238 = sphi 0, %s236
      %s239 = sphi 0, %s238
      %s253 = sphi 0, %s239
      %s261 = sphi 0, %s263
      %s264 = sphi 0, %s261
      %s265 = sphi 0, %s264
      %s281 = sphi 0, %s265
      %s289 = sphi 0, %s291
      %s292 = sphi 0, %s289
      %s293 = sphi 0, %s292
      %s309 = sphi 0, %s293
    $region4: #{tpu_custom_call.1} parent=1 // loop_header_branch
      %34 = sbr.rel (%p32) target = $region8
    $region5: #{tpu_custom_call.1} parent=1 // loop_body
      %s36 = ssub.s32 %s31, 1
      %s37 = ssub.s32 %s31, 2
      %s44 = sadd.s32 1, %s39
      %p45 = scmp.ge.s32.totalorder %s44, 1
      %s46 = scalar_select %p45, 0, %s44
      %s47 = sadd.s32 1, %s38
      %s48 = scalar_select %p45, %s47, %s38
      %p49 = scmp.ge.s32.totalorder %s48, 2
      %s50 = scalar_select %p49, 0, %s48
      %s51 = ssub.s32 %s38, %s50
      %s52 = ssub.s32 %s39, %s46
      %s53 = sor.u32 %s51, %s52
      %p54 = scmp.eq.s32.totalorder %s53, 0
      %s56 = sadd.s32 %s55, 1
      %s57 = scalar_select %p54, %s55, %s56
      %p60 = pneg %p54
      %p61 = scmp.eq.s32.totalorder %s31, 1
      %p62 = por %p60, %p61
      %p63 = scmp.ne.s32.totalorder %s55, %s58
      %p64 = scmp.eq.s32.totalorder %s31, 0
      %p65 = por %p63, %p64
      %p66 = scmp.ne.s32.totalorder %s55, %s58
      %p67 = scmp.eq.s32.totalorder %s36, 1
      %p68 = por %p66, %p67
      %p69 = scmp.ne.s32.totalorder %s58, %s59
      %p70 = scmp.eq.s32.totalorder %s36, 0
      %p71 = por %p69, %p70
      %p72 = scmp.ne.s32.totalorder %s58, %s59
      %p73 = scmp.eq.s32.totalorder %s37, 1
      %p74 = por %p72, %p73
      %p76 = scmp.ne.s32.totalorder %s59, %s75
      %p77 = scmp.eq.s32.totalorder %s37, 0
      %p78 = por %p76, %p77
      %s79 = ssub.s32 %s38, %s50
      %p80 = scmp.eq.s32.totalorder %s79, 0
      %s82 = sadd.s32 %s81, 1
      %s83 = scalar_select %p80, %s81, %s82
      %p86 = pneg %p80
      %p87 = scmp.eq.s32.totalorder %s31, 1
      %p88 = por %p86, %p87
      %p89 = scmp.ne.s32.totalorder %s81, %s84
      %p90 = scmp.eq.s32.totalorder %s31, 0
      %p91 = por %p89, %p90
      %p92 = scmp.ne.s32.totalorder %s81, %s84
      %p93 = scmp.eq.s32.totalorder %s36, 1
      %p94 = por %p92, %p93
      %p95 = scmp.ne.s32.totalorder %s84, %s85
      %p96 = scmp.eq.s32.totalorder %s36, 0
      %p97 = por %p95, %p96
      %p98 = scmp.ne.s32.totalorder %s84, %s85
      %p99 = scmp.eq.s32.totalorder %s37, 1
      %p100 = por %p98, %p99
      %p102 = scmp.ne.s32.totalorder %s85, %s101
      %p103 = scmp.eq.s32.totalorder %s37, 0
      %p104 = por %p102, %p103
      %s105 = ssub.s32 %s38, %s50
      %p106 = scmp.eq.s32.totalorder %s105, 0
      %s108 = sadd.s32 %s107, 1
      %s109 = scalar_select %p106, %s107, %s108
      %p112 = pneg %p106
      %p113 = scmp.eq.s32.totalorder %s31, 1
      %p114 = por %p112, %p113
      %p115 = scmp.ne.s32.totalorder %s107, %s110
      %p116 = scmp.eq.s32.totalorder %s31, 0
      %p117 = por %p115, %p116
      %p118 = scmp.ne.s32.totalorder %s107, %s110
      %p119 = scmp.eq.s32.totalorder %s36, 1
      %p120 = por %p118, %p119
      %p121 = scmp.ne.s32.totalorder %s110, %s111
      %p122 = scmp.eq.s32.totalorder %s36, 0
      %p123 = por %p121, %p122
      %p124 = scmp.ne.s32.totalorder %s110, %s111
      %p125 = scmp.eq.s32.totalorder %s37, 1
      %p126 = por %p124, %p125
      %p128 = scmp.ne.s32.totalorder %s111, %s127
      %p129 = scmp.eq.s32.totalorder %s37, 0
      %p130 = por %p128, %p129
      %s132 = sadd.s32 %s131, 1
      %p135 = scmp.eq.s32.totalorder %s31, 1
      %p136 = scmp.ne.s32.totalorder %s131, %s133
      %p137 = scmp.eq.s32.totalorder %s31, 0
      %p138 = por %p136, %p137
      %p139 = scmp.ne.s32.totalorder %s131, %s133
      %p140 = scmp.eq.s32.totalorder %s36, 1
      %p141 = por %p139, %p140
      %p142 = scmp.ne.s32.totalorder %s133, %s134
      %p143 = scmp.eq.s32.totalorder %s36, 0
      %p144 = por %p142, %p143
      %p145 = scmp.ne.s32.totalorder %s133, %s134
      %p146 = scmp.eq.s32.totalorder %s37, 1
      %p147 = por %p145, %p146
      %p149 = scmp.ne.s32.totalorder %s134, %s148
      %p150 = scmp.eq.s32.totalorder %s37, 0
      %p151 = por %p149, %p150
      %s153 = sadd.s32 %s152, 1
      %p156 = scmp.eq.s32.totalorder %s31, 1
      %p157 = scmp.ne.s32.totalorder %s152, %s154
      %p158 = scmp.eq.s32.totalorder %s31, 0
      %p159 = por %p157, %p158
      %p160 = scmp.ne.s32.totalorder %s152, %s154
      %p161 = scmp.eq.s32.totalorder %s36, 1
      %p162 = por %p160, %p161
      %p163 = scmp.ne.s32.totalorder %s154, %s155
      %p164 = scmp.eq.s32.totalorder %s36, 0
      %p165 = por %p163, %p164
      %p166 = scmp.ne.s32.totalorder %s154, %s155
      %p167 = scmp.eq.s32.totalorder %s37, 1
      %p168 = por %p166, %p167
      %p170 = scmp.ne.s32.totalorder %s155, %s169
      %p171 = scmp.eq.s32.totalorder %s37, 0
      %p172 = por %p170, %p171
      %s174 = sadd.s32 %s173, 1
      %p177 = scmp.eq.s32.totalorder %s31, 1
      %p178 = scmp.ne.s32.totalorder %s173, %s175
      %p179 = scmp.eq.s32.totalorder %s31, 0
      %p180 = por %p178, %p179
      %p181 = scmp.ne.s32.totalorder %s173, %s175
      %p182 = scmp.eq.s32.totalorder %s36, 1
      %p183 = por %p181, %p182
      %p184 = scmp.ne.s32.totalorder %s175, %s176
      %p185 = scmp.eq.s32.totalorder %s36, 0
      %p186 = por %p184, %p185
      %p187 = scmp.ne.s32.totalorder %s175, %s176
      %p188 = scmp.eq.s32.totalorder %s37, 1
      %p189 = por %p187, %p188
      %p191 = scmp.ne.s32.totalorder %s176, %s190
      %p192 = scmp.eq.s32.totalorder %s37, 0
      %p193 = por %p191, %p192
      %s195 = sadd.s32 %s194, 1
      %p198 = scmp.eq.s32.totalorder %s31, 1
      %p199 = scmp.ne.s32.totalorder %s194, %s196
      %p200 = scmp.eq.s32.totalorder %s31, 0
      %p201 = por %p199, %p200
      %p202 = scmp.ne.s32.totalorder %s194, %s196
      %p203 = scmp.eq.s32.totalorder %s36, 1
      %p204 = por %p202, %p203
      %p205 = scmp.ne.s32.totalorder %s196, %s197
      %p206 = scmp.eq.s32.totalorder %s36, 0
      %p207 = por %p205, %p206
      %p208 = scmp.ne.s32.totalorder %s196, %s197
      %p209 = scmp.eq.s32.totalorder %s37, 1
      %p210 = por %p208, %p209
      %p212 = scmp.ne.s32.totalorder %s197, %s211
      %p213 = scmp.eq.s32.totalorder %s37, 0
      %p214 = por %p212, %p213
      %s216 = sadd.s32 %s215, 1
      %p219 = scmp.eq.s32.totalorder %s31, 1
      %p220 = scmp.ne.s32.totalorder %s215, %s217
      %p221 = scmp.eq.s32.totalorder %s31, 0
      %p222 = por %p220, %p221
      %p223 = scmp.ne.s32.totalorder %s215, %s217
      %p224 = scmp.eq.s32.totalorder %s36, 1
      %p225 = por %p223, %p224
      %p226 = scmp.ne.s32.totalorder %s217, %s218
      %p227 = scmp.eq.s32.totalorder %s36, 0
      %p228 = por %p226, %p227
      %p229 = scmp.ne.s32.totalorder %s217, %s218
      %p230 = scmp.eq.s32.totalorder %s37, 1
      %p231 = por %p229, %p230
      %p233 = scmp.ne.s32.totalorder %s218, %s232
      %p234 = scmp.eq.s32.totalorder %s37, 0
      %p235 = por %p233, %p234
      %s237 = sadd.s32 %s236, 1
      %p240 = scmp.eq.s32.totalorder %s31, 1
      %p241 = scmp.ne.s32.totalorder %s236, %s238
      %p242 = scmp.eq.s32.totalorder %s31, 0
      %p243 = por %p241, %p242
      %p244 = scmp.ne.s32.totalorder %s236, %s238
      %p245 = scmp.eq.s32.totalorder %s36, 1
      %p246 = por %p244, %p245
      %p247 = scmp.ne.s32.totalorder %s238, %s239
      %p248 = scmp.eq.s32.totalorder %s36, 0
      %p249 = por %p247, %p248
      %p250 = scmp.ne.s32.totalorder %s238, %s239
      %p251 = scmp.eq.s32.totalorder %s37, 1
      %p252 = por %p250, %p251
      %p254 = scmp.ne.s32.totalorder %s239, %s253
      %p255 = scmp.eq.s32.totalorder %s37, 0
      %p256 = por %p254, %p255
      %s257 = ssub.s32 %s38, %s50
      %s258 = ssub.s32 %s39, %s46
      %s259 = sor.u32 %s257, %s258
      %p260 = scmp.eq.s32.totalorder %s259, 0
      %s262 = sadd.s32 %s261, 1
      %s263 = scalar_select %p260, %s261, %s262
      %p266 = pneg %p260
      %p267 = scmp.eq.s32.totalorder %s31, 1
      %p268 = por %p266, %p267
      %p269 = scmp.ne.s32.totalorder %s261, %s264
      %p270 = scmp.eq.s32.totalorder %s31, 0
      %p271 = por %p269, %p270
      %p272 = scmp.ne.s32.totalorder %s261, %s264
      %p273 = scmp.eq.s32.totalorder %s36, 1
      %p274 = por %p272, %p273
      %p275 = scmp.ne.s32.totalorder %s264, %s265
      %p276 = scmp.eq.s32.totalorder %s36, 0
      %p277 = por %p275, %p276
      %p278 = scmp.ne.s32.totalorder %s264, %s265
      %p279 = scmp.eq.s32.totalorder %s37, 1
      %p280 = por %p278, %p279
      %p282 = scmp.ne.s32.totalorder %s265, %s281
      %p283 = scmp.eq.s32.totalorder %s37, 0
      %p284 = por %p282, %p283
      %s285 = ssub.s32 %s38, %s50
      %s286 = ssub.s32 %s39, %s46
      %s287 = sor.u32 %s285, %s286
      %p288 = scmp.eq.s32.totalorder %s287, 0
      %s290 = sadd.s32 %s289, 1
      %s291 = scalar_select %p288, %s289, %s290
      %p294 = pneg %p288
      %p295 = scmp.eq.s32.totalorder %s31, 1
      %p296 = por %p294, %p295
      %p297 = scmp.ne.s32.totalorder %s289, %s292
      %p298 = scmp.eq.s32.totalorder %s31, 0
      %p299 = por %p297, %p298
      %p300 = scmp.ne.s32.totalorder %s289, %s292
      %p301 = scmp.eq.s32.totalorder %s36, 1
      %p302 = por %p300, %p301
      %p303 = scmp.ne.s32.totalorder %s292, %s293
      %p304 = scmp.eq.s32.totalorder %s36, 0
      %p305 = por %p303, %p304
      %p306 = scmp.ne.s32.totalorder %s292, %s293
      %p307 = scmp.eq.s32.totalorder %s37, 1
      %p308 = por %p306, %p307
      %p310 = scmp.ne.s32.totalorder %s293, %s309
      %p311 = scmp.eq.s32.totalorder %s37, 0
      %p312 = por %p310, %p311
      %p313 = scmp.le.s32.totalorder 1, %s31
      %p314 = scmp.lt.s32.totalorder %s31, 3
      %p315 = pnand %p313, %p314
      %p316 = pneg %p315
      // Predicated region
      $region9: #{tpu_custom_call.1} parent=5 // pred_check
        _
      $region10: #{tpu_custom_call.1} parent=5 // pred_check_branch
        %318 = sbr.rel (%p315) target = $region12
      $region11: #{tpu_custom_call.1} parent=5 // pred_region
        %s319 = ssub.s32 %s31, 1
        // Predicated region
        $region13: #{tpu_custom_call.1} parent=11 // pred_check
          %p320 = pneg %p144
        $region14: #{tpu_custom_call.1} parent=11 // pred_check_branch
          %322 = sbr.rel (%p320) target = $region16
        $region15: #{tpu_custom_call.1} parent=11 // pred_region
          %s324 = ssub.s32 256, 256
          %325 = vsyncadd [#allocation11], %s324
          %s326 = sshll.u32 [#allocation10], 4
          %s327 = int_to_ptr.vmem [resolvable:$true] %s326
          %332 = dma.hbm_to_vmem [thread:$0]  %s3, 256, %s327, [#allocation11], 64, 64, 4
        $region16: #{tpu_custom_call.1} parent=11 // pred_fallthru
          _
        // Predicated region
        $region17: #{tpu_custom_call.1} parent=11 // pred_check
          %p333 = pneg %p165
        $region18: #{tpu_custom_call.1} parent=11 // pred_check_branch
          %335 = sbr.rel (%p333) target = $region20
        $region19: #{tpu_custom_call.1} parent=11 // pred_region
          %s337 = ssub.s32 256, 256
          %338 = vsyncadd [#allocation11], %s337
          %s339 = sshll.u32 [#allocation12], 4
          %s340 = int_to_ptr.vmem [resolvable:$true] %s339
          %345 = dma.hbm_to_vmem [thread:$0]  %s4, 256, %s340, [#allocation11], 64, 64, 4
        $region20: #{tpu_custom_call.1} parent=11 // pred_fallthru
          _
        // Predicated region
        $region21: #{tpu_custom_call.1} parent=11 // pred_check
          %p346 = pneg %p186
        $region22: #{tpu_custom_call.1} parent=11 // pred_check_branch
          %348 = sbr.rel (%p346) target = $region24
        $region23: #{tpu_custom_call.1} parent=11 // pred_region
          _
        $region24: #{tpu_custom_call.1} parent=11 // pred_fallthru
          _
        // Predicated region
        $region25: #{tpu_custom_call.1} parent=11 // pred_check
          %p349 = pneg %p207
        $region26: #{tpu_custom_call.1} parent=11 // pred_check_branch
          %351 = sbr.rel (%p349) target = $region28
        $region27: #{tpu_custom_call.1} parent=11 // pred_region
          %s353 = ssub.s32 256, 256
          %354 = vsyncadd [#allocation14], %s353
          %s355 = sshll.u32 [#allocation13], 4
          %s356 = int_to_ptr.vmem [resolvable:$true] %s355
          %361 = dma.hbm_to_vmem [thread:$0]  %s6, 256, %s356, [#allocation14], 64, 64, 4
        $region28: #{tpu_custom_call.1} parent=11 // pred_fallthru
          _
        // Predicated region
        $region29: #{tpu_custom_call.1} parent=11 // pred_check
          %p362 = pneg %p228
        $region30: #{tpu_custom_call.1} parent=11 // pred_check_branch
          %364 = sbr.rel (%p362) target = $region32
        $region31: #{tpu_custom_call.1} parent=11 // pred_region
          _
        $region32: #{tpu_custom_call.1} parent=11 // pred_fallthru
          _
        // Predicated region
        $region33: #{tpu_custom_call.1} parent=11 // pred_check
          %p365 = pneg %p249
        $region34: #{tpu_custom_call.1} parent=11 // pred_check_branch
          %367 = sbr.rel (%p365) target = $region36
        $region35: #{tpu_custom_call.1} parent=11 // pred_region
          _
        $region36: #{tpu_custom_call.1} parent=11 // pred_fallthru
          _
      $region12: #{tpu_custom_call.1} parent=5 // pred_fallthru
        _
      %p368 = scmp.lt.s32.totalorder %s31, 2
      // Predicated region
      $region37: #{tpu_custom_call.1} parent=5 // pred_check
        %p369 = pneg %p368
      $region38: #{tpu_custom_call.1} parent=5 // pred_check_branch
        %371 = sbr.rel (%p369) target = $region40
      $region39: #{tpu_custom_call.1} parent=5 // pred_region
        // Predicated region
        $region41: #{tpu_custom_call.1} parent=39 // pred_check
          %p372 = pneg %p65
        $region42: #{tpu_custom_call.1} parent=39 // pred_check_branch
          %374 = sbr.rel (%p372) target = $region44
        $region43: #{tpu_custom_call.1} parent=39 // pred_region
          %s375 = sand.u32 %s55, 1
          %s376 = scalar_lea.sflag [#allocation5], %s375
          %s377 = sand.u32 %s55, 1
          %s378 = smul.addr %s377, 8
          %s379 = scalar_lea.vmem [#allocation4], %s378
          %s381 = ssub.s32 128, 128
          %382 = vsyncadd %s376, %s381
          %s383 = sadd.s32 %s39, %s38
          %s384 = smul.addr %s383, 128
          %s385 = scalar_lea.hbm %s0, %s384
          %s387 = sshll.u32 %s379, 4
          %s388 = int_to_ptr.vmem [resolvable:$true] %s387
          %390 = dma.hbm_to_vmem [thread:$0]  %s385, 128, %s388, %s376
        $region44: #{tpu_custom_call.1} parent=39 // pred_fallthru
          _
        // Predicated region
        $region45: #{tpu_custom_call.1} parent=39 // pred_check
          %p391 = pneg %p91
        $region46: #{tpu_custom_call.1} parent=39 // pred_check_branch
          %393 = sbr.rel (%p391) target = $region48
        $region47: #{tpu_custom_call.1} parent=39 // pred_region
          %s394 = sand.u32 %s31, 1
          %s395 = scalar_lea.sflag [#allocation8], %s394
          %s396 = sand.u32 %s81, 1
          %s397 = smul.addr %s396, 8
          %s398 = scalar_lea.vmem [#allocation7], %s397
          %s400 = ssub.s32 128, 128
          %401 = vsyncadd %s395, %s400
          %s402 = smul.addr %s38, 128
          %s403 = scalar_lea.hbm %s1, %s402
          %s405 = sshll.u32 %s398, 4
          %s406 = int_to_ptr.vmem [resolvable:$true] %s405
          %408 = dma.hbm_to_vmem [thread:$0]  %s403, 128, %s406, %s395
        $region48: #{tpu_custom_call.1} parent=39 // pred_fallthru
          _
        // Predicated region
        $region49: #{tpu_custom_call.1} parent=39 // pred_check
          %p409 = pneg %p117
        $region50: #{tpu_custom_call.1} parent=39 // pred_check_branch
          %411 = sbr.rel (%p409) target = $region52
        $region51: #{tpu_custom_call.1} parent=39 // pred_region
          %s412 = sand.u32 %s31, 1
          %s413 = scalar_lea.sflag [#allocation8], %s412
          %s414 = sand.u32 %s107, 1
          %s415 = smul.addr %s414, 8
          %s416 = scalar_lea.vmem [#allocation9], %s415
          %s418 = ssub.s32 128, 128
          %419 = vsyncadd %s413, %s418
          %s420 = smul.addr %s38, 128
          %s421 = scalar_lea.hbm %s2, %s420
          %s423 = sshll.u32 %s416, 4
          %s424 = int_to_ptr.vmem [resolvable:$true] %s423
          %426 = dma.hbm_to_vmem [thread:$0]  %s421, 128, %s424, %s413
        $region52: #{tpu_custom_call.1} parent=39 // pred_fallthru
          _
      $region40: #{tpu_custom_call.1} parent=5 // pred_fallthru
        _
      %p427 = scmp.le.s32.totalorder 1, %s31
      %p428 = scmp.lt.s32.totalorder %s31, 3
      %p429 = pnand %p427, %p428
      %p430 = pneg %p429
      // Predicated region
      $region53: #{tpu_custom_call.1} parent=5 // pred_check
        _
      $region54: #{tpu_custom_call.1} parent=5 // pred_check_branch
        %432 = sbr.rel (%p429) target = $region56
      $region55: #{tpu_custom_call.1} parent=5 // pred_region
        %s433 = ssub.s32 %s31, 1
        %s434 = sand.u32 %s58, 1
        %s435 = scalar_lea.sflag [#allocation5], %s434
        %s436 = sand.u32 %s58, 1
        %s437 = smul.addr %s436, 8
        %s438 = scalar_lea.vmem [#allocation4], %s437
        // Predicated region
        $region57: #{tpu_custom_call.1} parent=55 // pred_check
          %p439 = pneg %p71
        $region58: #{tpu_custom_call.1} parent=55 // pred_check_branch
          %441 = sbr.rel (%p439) target = $region60
        $region59: #{tpu_custom_call.1} parent=55 // pred_region
          %442 = dma.done %s435, 128
        $region60: #{tpu_custom_call.1} parent=55 // pred_fallthru
          _
        %s443 = sand.u32 %s36, 1
        %s444 = scalar_lea.sflag [#allocation8], %s443
        %s445 = sand.u32 %s84, 1
        %s446 = smul.addr %s445, 8
        %s447 = scalar_lea.vmem [#allocation7], %s446
        // Predicated region
        $region61: #{tpu_custom_call.1} parent=55 // pred_check
          %p448 = pneg %p97
        $region62: #{tpu_custom_call.1} parent=55 // pred_check_branch
          %450 = sbr.rel (%p448) target = $region64
        $region63: #{tpu_custom_call.1} parent=55 // pred_region
          %451 = dma.done %s444, 128
        $region64: #{tpu_custom_call.1} parent=55 // pred_fallthru
          _
        %s452 = sand.u32 %s36, 1
        %s453 = scalar_lea.sflag [#allocation8], %s452
        %s454 = sand.u32 %s110, 1
        %s455 = smul.addr %s454, 8
        %s456 = scalar_lea.vmem [#allocation9], %s455
        // Predicated region
        $region65: #{tpu_custom_call.1} parent=55 // pred_check
          %p457 = pneg %p123
        $region66: #{tpu_custom_call.1} parent=55 // pred_check_branch
          %459 = sbr.rel (%p457) target = $region68
        $region67: #{tpu_custom_call.1} parent=55 // pred_region
          %460 = dma.done %s453, 128
        $region68: #{tpu_custom_call.1} parent=55 // pred_fallthru
          _
        // Predicated region
        $region69: #{tpu_custom_call.1} parent=55 // pred_check
          %p461 = pneg %p144
        $region70: #{tpu_custom_call.1} parent=55 // pred_check_branch
          %463 = sbr.rel (%p461) target = $region72
        $region71: #{tpu_custom_call.1} parent=55 // pred_region
          %464 = dma.done [#allocation11], 256
        $region72: #{tpu_custom_call.1} parent=55 // pred_fallthru
          _
        // Predicated region
        $region73: #{tpu_custom_call.1} parent=55 // pred_check
          %p465 = pneg %p165
        $region74: #{tpu_custom_call.1} parent=55 // pred_check_branch
          %467 = sbr.rel (%p465) target = $region76
        $region75: #{tpu_custom_call.1} parent=55 // pred_region
          %468 = dma.done [#allocation11], 256
        $region76: #{tpu_custom_call.1} parent=55 // pred_fallthru
          _
        // Predicated region
        $region77: #{tpu_custom_call.1} parent=55 // pred_check
          %p469 = pneg %p207
        $region78: #{tpu_custom_call.1} parent=55 // pred_check_branch
          %471 = sbr.rel (%p469) target = $region80
        $region79: #{tpu_custom_call.1} parent=55 // pred_region
          %472 = dma.done [#allocation14], 256
        $region80: #{tpu_custom_call.1} parent=55 // pred_fallthru
          _
        %s473 = sand.u32 %s58, 1
        %s474 = scalar_lea.sflag [#allocation5], %s473
        %s475 = sand.u32 %s58, 1
        %s476 = smul.addr %s475, 8
        %s477 = scalar_lea.vmem [#allocation4], %s476
        %p478 = pneg %p71
        %p479 = pneg %p68
        %s480 = sand.u32 %s36, 1
        %s481 = scalar_lea.sflag [#allocation8], %s480
        %s482 = sand.u32 %s84, 1
        %s483 = smul.addr %s482, 8
        %s484 = scalar_lea.vmem [#allocation7], %s483
        %p485 = pneg %p97
        %p486 = pneg %p94
        %s487 = sand.u32 %s36, 1
        %s488 = scalar_lea.sflag [#allocation8], %s487
        %s489 = sand.u32 %s110, 1
        %s490 = smul.addr %s489, 8
        %s491 = scalar_lea.vmem [#allocation9], %s490
        %p492 = pneg %p123
        %p493 = pneg %p120
        %p494 = pneg %p144
        %p495 = pneg %p141
        %p496 = pneg %p165
        %p497 = pneg %p162
        %p498 = pneg %p186
        %p499 = pneg %p183
        %p500 = pneg %p207
        %p501 = pneg %p204
        %p502 = pneg %p228
        %p503 = pneg %p225
        %p504 = pneg %p249
        %p505 = pneg %p246
        %p506 = pneg %p277
        %p507 = pneg %p274
        %s508 = sand.u32 %s264, 1
        %s509 = scalar_lea.sflag [#allocation6], %s508
        %s510 = sand.u32 %s264, 1
        %s511 = smul.addr %s510, 8
        %s512 = scalar_lea.vmem [#allocation15], %s511
        %p513 = pneg %p305
        %p514 = pneg %p302
        %s515 = sand.u32 %s292, 1
        %s516 = scalar_lea.sflag [#allocation17], %s515
        %s517 = sand.u32 %s292, 1
        %s518 = smul.addr %s517, 32
        %s519 = scalar_lea.vmem [#allocation16], %s518
        %p521 = scmp.eq.s32.totalorder %s41, 0
        // Predicated region
        $region81: #{tpu_custom_call.1} parent=55 // pred_check
          %p522 = pneg %p521
        $region82: #{tpu_custom_call.1} parent=55 // pred_check_branch
          %524 = sbr.rel (%p522) target = $region84
        $region83: #{tpu_custom_call.1} parent=55 // pred_region
          %v525 = vld [vmem:[%s447] sm:$0xff]
          %v526 = vpack.c.bf16 %v525, %v525
          %v527 = vld [vmem:[%s456] sm:$0xff]
          %v528 = vpack.c.bf16 %v527, %v527
          %v529 = vld [vmem:[#allocation12] sm:$0xf]
          %v530 = vld [vmem:[#allocation12 + $0x4] sm:$0xf]
          %v531 = vld [vmem:[#allocation12 + $0x8] sm:$0xf]
          %v532 = vld [vmem:[#allocation12 + $0xc] sm:$0xf]
          %v537 = vunpack.c.l.b16 %v529
          %v538 = vunpack.c.l.b16 %v530
          %v539 = vunpack.c.l.b16 %v531
          %v540 = vunpack.c.l.b16 %v532
          %v541 = vpack.c.b16 %v538, %v537
          %v542 = vpack.c.b16 %v540, %v539
          %vm545 = vcmask 261120
          %v547 = vsel %vm545, %v526, 0
          %549 = vmatprep.subr.bf16.mxu0 0
          %550 = vmatpush1.bf16.msra.mxu0 %v541
          %551 = vmatprep.subr.bf16.mxu0 0
          %552 = vmatpush1.bf16.msra.mxu0 %v542
          %553 = vmatprep.subr.bf16.mxu0 0
          %554 = vmatpush1.bf16.msra.mxu0 0
          %555 = vmatprep.subr.bf16.mxu0 0
          %556 = vmatpush1.bf16.msra.mxu0 0
          %557 = vmatprep.subr.bf16.mxu0 0
          %558 = vmatpush1.bf16.msra.mxu0 0
          %559 = vmatprep.subr.bf16.mxu0 0
          %560 = vmatpush1.bf16.msra.mxu0 0
          %561 = vmatprep.subr.bf16.mxu0 0
          %562 = vmatpush1.bf16.msra.mxu0 0
          %563 = vmatprep.subr.bf16.mxu0 0
          %564 = vmatpush1.bf16.msra.mxu0 0
          %565 = vmatprep.subr.bf16.mxu0 0
          %566 = vmatpush1.bf16.msra.mxu0 0
          %567 = vmatprep.subr.bf16.mxu0 0
          %568 = vmatpush1.bf16.msra.mxu0 0
          %569 = vmatprep.subr.bf16.mxu0 0
          %570 = vmatpush1.bf16.msra.mxu0 0
          %571 = vmatprep.subr.bf16.mxu0 0
          %572 = vmatpush1.bf16.msra.mxu0 0
          %573 = vmatprep.subr.bf16.mxu0 0
          %574 = vmatpush1.bf16.msra.mxu0 0
          %575 = vmatprep.subr.bf16.mxu0 0
          %576 = vmatpush1.bf16.msra.mxu0 0
          %577 = vmatprep.subr.bf16.mxu0 0
          %578 = vmatpush1.bf16.msra.mxu0 0
          %579 = vmatprep.subr.bf16.mxu0 0
          %580 = vmatpush1.bf16.msra.mxu0 0
          %581 = vmatprep.mubr.bf16.mxu0 0
          %582 = vmatmul.mubr.bf16.gmra.mrb[0].mxu0 %v547
          %v583 = vpop.f32.mrb[0].mxu0
          %v584 = vadd.f32 0.0, %v583
          %v585 = vpop.f32.mrb[0].mxu0
          %v586 = vpop.f32.mrb[0].mxu0
          %v587 = vpop.f32.mrb[0].mxu0
          %588 = vdwg.mxu0
          %v589 = vpack.c.bf16 %v584, %v584
          %vm590 = vcmask 257024
          %591 = vst.msk [vmem:[#allocation2] sm:$0xf] %vm590, %v589
          %v592 = vld [vmem:[%s5] sm:$0xf]
          %v593 = vld [vmem:[%s5 + $0x4] sm:$0xf]
          %v594 = vld [vmem:[%s5 + $0x8] sm:$0xf]
          %v595 = vld [vmem:[%s5 + $0xc] sm:$0xf]
          %v600 = vunpack.c.l.b16 %v592
          %v601 = vunpack.c.l.b16 %v593
          %v602 = vunpack.c.l.b16 %v594
          %v603 = vunpack.c.l.b16 %v595
          %v604 = vpack.c.b16 %v601, %v600
          %v605 = vpack.c.b16 %v603, %v602
          %v609 = vsel %vm545, %v528, 0
          %611 = vmatprep.subr.bf16.mxu0 0
          %612 = vmatpush1.bf16.msra.mxu0 %v604
          %613 = vmatprep.subr.bf16.mxu0 0
          %614 = vmatpush1.bf16.msra.mxu0 %v605
          %615 = vmatprep.subr.bf16.mxu0 0
          %616 = vmatpush1.bf16.msra.mxu0 0
          %617 = vmatprep.subr.bf16.mxu0 0
          %618 = vmatpush1.bf16.msra.mxu0 0
          %619 = vmatprep.subr.bf16.mxu0 0
          %620 = vmatpush1.bf16.msra.mxu0 0
          %621 = vmatprep.subr.bf16.mxu0 0
          %622 = vmatpush1.bf16.msra.mxu0 0
          %623 = vmatprep.subr.bf16.mxu0 0
          %624 = vmatpush1.bf16.msra.mxu0 0
          %625 = vmatprep.subr.bf16.mxu0 0
          %626 = vmatpush1.bf16.msra.mxu0 0
          %627 = vmatprep.subr.bf16.mxu0 0
          %628 = vmatpush1.bf16.msra.mxu0 0
          %629 = vmatprep.subr.bf16.mxu0 0
          %630 = vmatpush1.bf16.msra.mxu0 0
          %631 = vmatprep.subr.bf16.mxu0 0
          %632 = vmatpush1.bf16.msra.mxu0 0
          %633 = vmatprep.subr.bf16.mxu0 0
          %634 = vmatpush1.bf16.msra.mxu0 0
          %635 = vmatprep.subr.bf16.mxu0 0
          %636 = vmatpush1.bf16.msra.mxu0 0
          %637 = vmatprep.subr.bf16.mxu0 0
          %638 = vmatpush1.bf16.msra.mxu0 0
          %639 = vmatprep.subr.bf16.mxu0 0
          %640 = vmatpush1.bf16.msra.mxu0 0
          %641 = vmatprep.subr.bf16.mxu0 0
          %642 = vmatpush1.bf16.msra.mxu0 0
          %643 = vmatprep.mubr.bf16.mxu0 0
          %644 = vmatmul.mubr.bf16.gmra.mrb[0].mxu0 %v609
          %v645 = vpop.f32.mrb[0].mxu0
          %v646 = vadd.f32 0.0, %v645
          %v647 = vpop.f32.mrb[0].mxu0
          %v648 = vpop.f32.mrb[0].mxu0
          %v649 = vpop.f32.mrb[0].mxu0
          %650 = vdwg.mxu0
          %v651 = vpack.c.bf16 %v646, %v646
          %652 = vst.msk [vmem:[#allocation3] sm:$0xf] %vm590, %v651
        $region84: #{tpu_custom_call.1} parent=55 // pred_fallthru
          _
        %v653 = vld [vmem:[%s438] sm:$0xff]
        %v654 = vpack.c.bf16 %v653, %v653
        %v655 = vld [vmem:[#allocation10] sm:$0xf]
        %v656 = vld [vmem:[#allocation10 + $0x4] sm:$0xf]
        %v657 = vld [vmem:[#allocation10 + $0x8] sm:$0xf]
        %v658 = vld [vmem:[#allocation10 + $0xc] sm:$0xf]
        %v663 = vunpack.c.l.b16 %v655
        %v664 = vunpack.c.l.b16 %v656
        %v665 = vunpack.c.l.b16 %v657
        %v666 = vunpack.c.l.b16 %v658
        %v667 = vpack.c.b16 %v664, %v663
        %v668 = vpack.c.b16 %v666, %v665
        %vm671 = vcmask 261120
        %v673 = vsel %vm671, %v654, 0
        %675 = vmatprep.subr.bf16.mxu0 0
        %676 = vmatpush1.bf16.msra.mxu0 %v667
        %677 = vmatprep.subr.bf16.mxu0 0
        %678 = vmatpush1.bf16.msra.mxu0 %v668
        %679 = vmatprep.subr.bf16.mxu0 0
        %680 = vmatpush1.bf16.msra.mxu0 0
        %681 = vmatprep.subr.bf16.mxu0 0
        %682 = vmatpush1.bf16.msra.mxu0 0
        %683 = vmatprep.subr.bf16.mxu0 0
        %684 = vmatpush1.bf16.msra.mxu0 0
        %685 = vmatprep.subr.bf16.mxu0 0
        %686 = vmatpush1.bf16.msra.mxu0 0
        %687 = vmatprep.subr.bf16.mxu0 0
        %688 = vmatpush1.bf16.msra.mxu0 0
        %689 = vmatprep.subr.bf16.mxu0 0
        %690 = vmatpush1.bf16.msra.mxu0 0
        %691 = vmatprep.subr.bf16.mxu0 0
        %692 = vmatpush1.bf16.msra.mxu0 0
        %693 = vmatprep.subr.bf16.mxu0 0
        %694 = vmatpush1.bf16.msra.mxu0 0
        %695 = vmatprep.subr.bf16.mxu0 0
        %696 = vmatpush1.bf16.msra.mxu0 0
        %697 = vmatprep.subr.bf16.mxu0 0
        %698 = vmatpush1.bf16.msra.mxu0 0
        %699 = vmatprep.subr.bf16.mxu0 0
        %700 = vmatpush1.bf16.msra.mxu0 0
        %701 = vmatprep.subr.bf16.mxu0 0
        %702 = vmatpush1.bf16.msra.mxu0 0
        %703 = vmatprep.subr.bf16.mxu0 0
        %704 = vmatpush1.bf16.msra.mxu0 0
        %705 = vmatprep.subr.bf16.mxu0 0
        %706 = vmatpush1.bf16.msra.mxu0 0
        %707 = vmatprep.mubr.bf16.mxu0 0
        %708 = vmatmul.mubr.bf16.gmra.mrb[0].mxu0 %v673
        %v709 = vpop.f32.mrb[0].mxu0
        %v710 = vadd.f32 0.0, %v709
        %v711 = vpop.f32.mrb[0].mxu0
        %v712 = vpop.f32.mrb[0].mxu0
        %v713 = vpop.f32.mrb[0].mxu0
        %714 = vdwg.mxu0
        %v715 = vpack.c.bf16 %v710, %v710
        %v716 = vld [vmem:[#allocation2] sm:$0xf]
        %v717 = vld [vmem:[#allocation3] sm:$0xf]
        %vm718 = vcmask 64512
        %v720 = vsel %vm718, %v715, 0
        %v723 = vsel %vm718, %v716, 0
        %725 = vmatprep.subr.bf16.mxu0 0
        %726 = vmatpush1.bf16.xpose.msra.mxu0 %v723
        %727 = vmatprep.subr.bf16.mxu0 0
        %728 = vmatpush1.bf16.xpose.msra.mxu0 0
        %729 = vmatprep.subr.bf16.mxu0 0
        %730 = vmatpush1.bf16.xpose.msra.mxu0 0
        %731 = vmatprep.subr.bf16.mxu0 0
        %732 = vmatpush1.bf16.xpose.msra.mxu0 0
        %733 = vmatprep.subr.bf16.mxu0 0
        %734 = vmatpush1.bf16.xpose.msra.mxu0 0
        %735 = vmatprep.subr.bf16.mxu0 0
        %736 = vmatpush1.bf16.xpose.msra.mxu0 0
        %737 = vmatprep.subr.bf16.mxu0 0
        %738 = vmatpush1.bf16.xpose.msra.mxu0 0
        %739 = vmatprep.subr.bf16.mxu0 0
        %740 = vmatpush1.bf16.xpose.msra.mxu0 0
        %741 = vmatprep.subr.bf16.mxu0 0
        %742 = vmatpush1.bf16.xpose.msra.mxu0 0
        %743 = vmatprep.subr.bf16.mxu0 0
        %744 = vmatpush1.bf16.xpose.msra.mxu0 0
        %745 = vmatprep.subr.bf16.mxu0 0
        %746 = vmatpush1.bf16.xpose.msra.mxu0 0
        %747 = vmatprep.subr.bf16.mxu0 0
        %748 = vmatpush1.bf16.xpose.msra.mxu0 0
        %749 = vmatprep.subr.bf16.mxu0 0
        %750 = vmatpush1.bf16.xpose.msra.mxu0 0
        %751 = vmatprep.subr.bf16.mxu0 0
        %752 = vmatpush1.bf16.xpose.msra.mxu0 0
        %753 = vmatprep.subr.bf16.mxu0 0
        %754 = vmatpush1.bf16.xpose.msra.mxu0 0
        %755 = vmatprep.subr.bf16.mxu0 0
        %756 = vmatpush1.bf16.xpose.msra.mxu0 0
        %757 = vmatprep.mubr.bf16.mxu0 0
        %758 = vmatmul.mubr.bf16.gmra.mrb[0].mxu0 %v720
        %v759 = vpop.f32.mrb[0].mxu0
        %v760 = vadd.f32 0.0, %v759
        %v761 = vpop.f32.mrb[0].mxu0
        %v762 = vpop.f32.mrb[0].mxu0
        %v763 = vpop.f32.mrb[0].mxu0
        %764 = vdwg.mxu0
        %v765 = vsel %vm718, %v760, -inf
        %766 = vmax.xlane.f32.xlu0 %v765
        %v767 = vpop.xlane.xlu0 %766
        %v768 = vsub.f32 %v760, %v767
        %v769 = vmul.f32 %v768, 1.442695
        %v770 = vpow.pop %v769
        %v771 = vsel %vm718, %v770, 0.0
        %772 = vadd.xlane.f32.xlu0 %v771
        %v773 = vpop.xlane.xlu0 %772
        %v774 = vrcp.pop %v773
        %v775 = vmul.f32 %v770, %v774
        %776 = vst.msk [vmem:[%s519] sm:$0xff] %vm718, %v775
        %v777 = vpack.c.bf16 %v775, %v775
        %v779 = vsel %vm718, %v777, 0
        %vm781 = vcmask 1043456
        %v783 = vsel %vm781, %v717, 0
        %785 = vmatprep.subr.bf16.mxu0 0
        %786 = vmatpush1.bf16.msra.mxu0 %v783
        %787 = vmatprep.subr.bf16.mxu0 0
        %788 = vmatpush1.bf16.msra.mxu0 0
        %789 = vmatprep.subr.bf16.mxu0 0
        %790 = vmatpush1.bf16.msra.mxu0 0
        %791 = vmatprep.subr.bf16.mxu0 0
        %792 = vmatpush1.bf16.msra.mxu0 0
        %793 = vmatprep.subr.bf16.mxu0 0
        %794 = vmatpush1.bf16.msra.mxu0 0
        %795 = vmatprep.subr.bf16.mxu0 0
        %796 = vmatpush1.bf16.msra.mxu0 0
        %797 = vmatprep.subr.bf16.mxu0 0
        %798 = vmatpush1.bf16.msra.mxu0 0
        %799 = vmatprep.subr.bf16.mxu0 0
        %800 = vmatpush1.bf16.msra.mxu0 0
        %801 = vmatprep.subr.bf16.mxu0 0
        %802 = vmatpush1.bf16.msra.mxu0 0
        %803 = vmatprep.subr.bf16.mxu0 0
        %804 = vmatpush1.bf16.msra.mxu0 0
        %805 = vmatprep.subr.bf16.mxu0 0
        %806 = vmatpush1.bf16.msra.mxu0 0
        %807 = vmatprep.subr.bf16.mxu0 0
        %808 = vmatpush1.bf16.msra.mxu0 0
        %809 = vmatprep.subr.bf16.mxu0 0
        %810 = vmatpush1.bf16.msra.mxu0 0
        %811 = vmatprep.subr.bf16.mxu0 0
        %812 = vmatpush1.bf16.msra.mxu0 0
        %813 = vmatprep.subr.bf16.mxu0 0
        %814 = vmatpush1.bf16.msra.mxu0 0
        %815 = vmatprep.subr.bf16.mxu0 0
        %816 = vmatpush1.bf16.msra.mxu0 0
        %817 = vmatprep.mubr.bf16.mxu0 0
        %818 = vmatmul.mubr.bf16.gmra.mrb[0].mxu0 %v779
        %v819 = vpop.f32.mrb[0].mxu0
        %v820 = vadd.f32 0.0, %v819
        %v821 = vpop.f32.mrb[0].mxu0
        %v822 = vpop.f32.mrb[0].mxu0
        %v823 = vpop.f32.mrb[0].mxu0
        %824 = vdwg.mxu0
        %826 = vrot.lane.b32.xlu0 %v715, 120
        %v827 = vpop.permute.xlu0 %826
        %v829 = vunpack.c.l.b16 %v716
        %v830 = vpack.c.b16 %v829, %v829
        %831 = vrot.lane.b32.xlu0 %v830, 120
        %v832 = vpop.permute.xlu0 %831
        %v834 = vsel %vm718, %v827, 0
        %v837 = vsel %vm718, %v832, 0
        %839 = vmatprep.subr.bf16.mxu0 0
        %840 = vmatpush1.bf16.xpose.msra.mxu0 %v837
        %841 = vmatprep.subr.bf16.mxu0 0
        %842 = vmatpush1.bf16.xpose.msra.mxu0 0
        %843 = vmatprep.subr.bf16.mxu0 0
        %844 = vmatpush1.bf16.xpose.msra.mxu0 0
        %845 = vmatprep.subr.bf16.mxu0 0
        %846 = vmatpush1.bf16.xpose.msra.mxu0 0
        %847 = vmatprep.subr.bf16.mxu0 0
        %848 = vmatpush1.bf16.xpose.msra.mxu0 0
        %849 = vmatprep.subr.bf16.mxu0 0
        %850 = vmatpush1.bf16.xpose.msra.mxu0 0
        %851 = vmatprep.subr.bf16.mxu0 0
        %852 = vmatpush1.bf16.xpose.msra.mxu0 0
        %853 = vmatprep.subr.bf16.mxu0 0
        %854 = vmatpush1.bf16.xpose.msra.mxu0 0
        %855 = vmatprep.subr.bf16.mxu0 0
        %856 = vmatpush1.bf16.xpose.msra.mxu0 0
        %857 = vmatprep.subr.bf16.mxu0 0
        %858 = vmatpush1.bf16.xpose.msra.mxu0 0
        %859 = vmatprep.subr.bf16.mxu0 0
        %860 = vmatpush1.bf16.xpose.msra.mxu0 0
        %861 = vmatprep.subr.bf16.mxu0 0
        %862 = vmatpush1.bf16.xpose.msra.mxu0 0
        %863 = vmatprep.subr.bf16.mxu0 0
        %864 = vmatpush1.bf16.xpose.msra.mxu0 0
        %865 = vmatprep.subr.bf16.mxu0 0
        %866 = vmatpush1.bf16.xpose.msra.mxu0 0
        %867 = vmatprep.subr.bf16.mxu0 0
        %868 = vmatpush1.bf16.xpose.msra.mxu0 0
        %869 = vmatprep.subr.bf16.mxu0 0
        %870 = vmatpush1.bf16.xpose.msra.mxu0 0
        %871 = vmatprep.mubr.bf16.mxu0 0
        %872 = vmatmul.mubr.bf16.gmra.mrb[0].mxu0 %v834
        %v873 = vpop.f32.mrb[0].mxu0
        %v874 = vadd.f32 0.0, %v873
        %v875 = vpop.f32.mrb[0].mxu0
        %v876 = vpop.f32.mrb[0].mxu0
        %v877 = vpop.f32.mrb[0].mxu0
        %878 = vdwg.mxu0
        %v879 = vsel %vm718, %v874, -inf
        %880 = vmax.xlane.f32.xlu0 %v879
        %v881 = vpop.xlane.xlu0 %880
        %v882 = vsub.f32 %v874, %v881
        %v883 = vmul.f32 %v882, 1.442695
        %v884 = vpow.pop %v883
        %v885 = vsel %vm718, %v884, 0.0
        %886 = vadd.xlane.f32.xlu0 %v885
        %v887 = vpop.xlane.xlu0 %886
        %v888 = vrcp.pop %v887
        %v889 = vmul.f32 %v884, %v888
        %s890 = scalar_lea.vmem %s519, 8 [#allocation16]
        %891 = vst.msk [vmem:[%s890] sm:$0xff] %vm718, %v889
        %v892 = vpack.c.bf16 %v889, %v889
        %v894 = vunpack.c.l.b16 %v717
        %v895 = vpack.c.b16 %v894, %v894
        %896 = vrot.lane.b32.xlu0 %v895, 120
        %v897 = vpop.permute.xlu0 %896
        %v899 = vsel %vm718, %v892, 0
        %v902 = vsel %vm781, %v897, 0
        %904 = vmatprep.subr.bf16.mxu0 0
        %905 = vmatpush1.bf16.msra.mxu0 %v902
        %906 = vmatprep.subr.bf16.mxu0 0
        %907 = vmatpush1.bf16.msra.mxu0 0
        %908 = vmatprep.subr.bf16.mxu0 0
        %909 = vmatpush1.bf16.msra.mxu0 0
        %910 = vmatprep.subr.bf16.mxu0 0
        %911 = vmatpush1.bf16.msra.mxu0 0
        %912 = vmatprep.subr.bf16.mxu0 0
        %913 = vmatpush1.bf16.msra.mxu0 0
        %914 = vmatprep.subr.bf16.mxu0 0
        %915 = vmatpush1.bf16.msra.mxu0 0
        %916 = vmatprep.subr.bf16.mxu0 0
        %917 = vmatpush1.bf16.msra.mxu0 0
        %918 = vmatprep.subr.bf16.mxu0 0
        %919 = vmatpush1.bf16.msra.mxu0 0
        %920 = vmatprep.subr.bf16.mxu0 0
        %921 = vmatpush1.bf16.msra.mxu0 0
        %922 = vmatprep.subr.bf16.mxu0 0
        %923 = vmatpush1.bf16.msra.mxu0 0
        %924 = vmatprep.subr.bf16.mxu0 0
        %925 = vmatpush1.bf16.msra.mxu0 0
        %926 = vmatprep.subr.bf16.mxu0 0
        %927 = vmatpush1.bf16.msra.mxu0 0
        %928 = vmatprep.subr.bf16.mxu0 0
        %929 = vmatpush1.bf16.msra.mxu0 0
        %930 = vmatprep.subr.bf16.mxu0 0
        %931 = vmatpush1.bf16.msra.mxu0 0
        %932 = vmatprep.subr.bf16.mxu0 0
        %933 = vmatpush1.bf16.msra.mxu0 0
        %934 = vmatprep.subr.bf16.mxu0 0
        %935 = vmatpush1.bf16.msra.mxu0 0
        %936 = vmatprep.mubr.bf16.mxu0 0
        %937 = vmatmul.mubr.bf16.gmra.mrb[0].mxu0 %v899
        %v938 = vpop.f32.mrb[0].mxu0
        %v939 = vadd.f32 0.0, %v938
        %v940 = vpop.f32.mrb[0].mxu0
        %v941 = vpop.f32.mrb[0].mxu0
        %v942 = vpop.f32.mrb[0].mxu0
        %943 = vdwg.mxu0
        %944 = vrot.lane.b32.xlu0 %v715, 112
        %v945 = vpop.permute.xlu0 %944
        %946 = vrot.lane.b32.xlu0 %v830, 112
        %v947 = vpop.permute.xlu0 %946
        %v949 = vsel %vm718, %v945, 0
        %v952 = vsel %vm718, %v947, 0
        %954 = vmatprep.subr.bf16.mxu0 0
        %955 = vmatpush1.bf16.xpose.msra.mxu0 %v952
        %956 = vmatprep.subr.bf16.mxu0 0
        %957 = vmatpush1.bf16.xpose.msra.mxu0 0
        %958 = vmatprep.subr.bf16.mxu0 0
        %959 = vmatpush1.bf16.xpose.msra.mxu0 0
        %960 = vmatprep.subr.bf16.mxu0 0
        %961 = vmatpush1.bf16.xpose.msra.mxu0 0
        %962 = vmatprep.subr.bf16.mxu0 0
        %963 = vmatpush1.bf16.xpose.msra.mxu0 0
        %964 = vmatprep.subr.bf16.mxu0 0
        %965 = vmatpush1.bf16.xpose.msra.mxu0 0
        %966 = vmatprep.subr.bf16.mxu0 0
        %967 = vmatpush1.bf16.xpose.msra.mxu0 0
        %968 = vmatprep.subr.bf16.mxu0 0
        %969 = vmatpush1.bf16.xpose.msra.mxu0 0
        %970 = vmatprep.subr.bf16.mxu0 0
        %971 = vmatpush1.bf16.xpose.msra.mxu0 0
        %972 = vmatprep.subr.bf16.mxu0 0
        %973 = vmatpush1.bf16.xpose.msra.mxu0 0
        %974 = vmatprep.subr.bf16.mxu0 0
        %975 = vmatpush1.bf16.xpose.msra.mxu0 0
        %976 = vmatprep.subr.bf16.mxu0 0
        %977 = vmatpush1.bf16.xpose.msra.mxu0 0
        %978 = vmatprep.subr.bf16.mxu0 0
        %979 = vmatpush1.bf16.xpose.msra.mxu0 0
        %980 = vmatprep.subr.bf16.mxu0 0
        %981 = vmatpush1.bf16.xpose.msra.mxu0 0
        %982 = vmatprep.subr.bf16.mxu0 0
        %983 = vmatpush1.bf16.xpose.msra.mxu0 0
        %984 = vmatprep.subr.bf16.mxu0 0
        %985 = vmatpush1.bf16.xpose.msra.mxu0 0
        %986 = vmatprep.mubr.bf16.mxu0 0
        %987 = vmatmul.mubr.bf16.gmra.mrb[0].mxu0 %v949
        %v988 = vpop.f32.mrb[0].mxu0
        %v989 = vadd.f32 0.0, %v988
        %v990 = vpop.f32.mrb[0].mxu0
        %v991 = vpop.f32.mrb[0].mxu0
        %v992 = vpop.f32.mrb[0].mxu0
        %993 = vdwg.mxu0
        %v994 = vsel %vm718, %v989, -inf
        %995 = vmax.xlane.f32.xlu0 %v994
        %v996 = vpop.xlane.xlu0 %995
        %v997 = vsub.f32 %v989, %v996
        %v998 = vmul.f32 %v997, 1.442695
        %v999 = vpow.pop %v998
        %v1000 = vsel %vm718, %v999, 0.0
        %1001 = vadd.xlane.f32.xlu0 %v1000
        %v1002 = vpop.xlane.xlu0 %1001
        %v1003 = vrcp.pop %v1002
        %v1004 = vmul.f32 %v999, %v1003
        %s1005 = scalar_lea.vmem %s519, 16 [#allocation16]
        %1006 = vst.msk [vmem:[%s1005] sm:$0xff] %vm718, %v1004
        %v1007 = vpack.c.bf16 %v1004, %v1004
        %1008 = vrot.lane.b32.xlu0 %v895, 112
        %v1009 = vpop.permute.xlu0 %1008
        %v1011 = vsel %vm718, %v1007, 0
        %v1014 = vsel %vm781, %v1009, 0
        %1016 = vmatprep.subr.bf16.mxu0 0
        %1017 = vmatpush1.bf16.msra.mxu0 %v1014
        %1018 = vmatprep.subr.bf16.mxu0 0
        %1019 = vmatpush1.bf16.msra.mxu0 0
        %1020 = vmatprep.subr.bf16.mxu0 0
        %1021 = vmatpush1.bf16.msra.mxu0 0
        %1022 = vmatprep.subr.bf16.mxu0 0
        %1023 = vmatpush1.bf16.msra.mxu0 0
        %1024 = vmatprep.subr.bf16.mxu0 0
        %1025 = vmatpush1.bf16.msra.mxu0 0
        %1026 = vmatprep.subr.bf16.mxu0 0
        %1027 = vmatpush1.bf16.msra.mxu0 0
        %1028 = vmatprep.subr.bf16.mxu0 0
        %1029 = vmatpush1.bf16.msra.mxu0 0
        %1030 = vmatprep.subr.bf16.mxu0 0
        %1031 = vmatpush1.bf16.msra.mxu0 0
        %1032 = vmatprep.subr.bf16.mxu0 0
        %1033 = vmatpush1.bf16.msra.mxu0 0
        %1034 = vmatprep.subr.bf16.mxu0 0
        %1035 = vmatpush1.bf16.msra.mxu0 0
        %1036 = vmatprep.subr.bf16.mxu0 0
        %1037 = vmatpush1.bf16.msra.mxu0 0
        %1038 = vmatprep.subr.bf16.mxu0 0
        %1039 = vmatpush1.bf16.msra.mxu0 0
        %1040 = vmatprep.subr.bf16.mxu0 0
        %1041 = vmatpush1.bf16.msra.mxu0 0
        %1042 = vmatprep.subr.bf16.mxu0 0
        %1043 = vmatpush1.bf16.msra.mxu0 0
        %1044 = vmatprep.subr.bf16.mxu0 0
        %1045 = vmatpush1.bf16.msra.mxu0 0
        %1046 = vmatprep.subr.bf16.mxu0 0
        %1047 = vmatpush1.bf16.msra.mxu0 0
        %1048 = vmatprep.mubr.bf16.mxu0 0
        %1049 = vmatmul.mubr.bf16.gmra.mrb[0].mxu0 %v1011
        %v1050 = vpop.f32.mrb[0].mxu0
        %v1051 = vadd.f32 0.0, %v1050
        %v1052 = vpop.f32.mrb[0].mxu0
        %v1053 = vpop.f32.mrb[0].mxu0
        %v1054 = vpop.f32.mrb[0].mxu0
        %1055 = vdwg.mxu0
        %1056 = vrot.lane.b32.xlu0 %v715, 104
        %v1057 = vpop.permute.xlu0 %1056
        %1058 = vrot.lane.b32.xlu0 %v830, 104
        %v1059 = vpop.permute.xlu0 %1058
        %v1061 = vsel %vm718, %v1057, 0
        %v1064 = vsel %vm718, %v1059, 0
        %1066 = vmatprep.subr.bf16.mxu0 0
        %1067 = vmatpush1.bf16.xpose.msra.mxu0 %v1064
        %1068 = vmatprep.subr.bf16.mxu0 0
        %1069 = vmatpush1.bf16.xpose.msra.mxu0 0
        %1070 = vmatprep.subr.bf16.mxu0 0
        %1071 = vmatpush1.bf16.xpose.msra.mxu0 0
        %1072 = vmatprep.subr.bf16.mxu0 0
        %1073 = vmatpush1.bf16.xpose.msra.mxu0 0
        %1074 = vmatprep.subr.bf16.mxu0 0
        %1075 = vmatpush1.bf16.xpose.msra.mxu0 0
        %1076 = vmatprep.subr.bf16.mxu0 0
        %1077 = vmatpush1.bf16.xpose.msra.mxu0 0
        %1078 = vmatprep.subr.bf16.mxu0 0
        %1079 = vmatpush1.bf16.xpose.msra.mxu0 0
        %1080 = vmatprep.subr.bf16.mxu0 0
        %1081 = vmatpush1.bf16.xpose.msra.mxu0 0
        %1082 = vmatprep.subr.bf16.mxu0 0
        %1083 = vmatpush1.bf16.xpose.msra.mxu0 0
        %1084 = vmatprep.subr.bf16.mxu0 0
        %1085 = vmatpush1.bf16.xpose.msra.mxu0 0
        %1086 = vmatprep.subr.bf16.mxu0 0
        %1087 = vmatpush1.bf16.xpose.msra.mxu0 0
        %1088 = vmatprep.subr.bf16.mxu0 0
        %1089 = vmatpush1.bf16.xpose.msra.mxu0 0
        %1090 = vmatprep.subr.bf16.mxu0 0
        %1091 = vmatpush1.bf16.xpose.msra.mxu0 0
        %1092 = vmatprep.subr.bf16.mxu0 0
        %1093 = vmatpush1.bf16.xpose.msra.mxu0 0
        %1094 = vmatprep.subr.bf16.mxu0 0
        %1095 = vmatpush1.bf16.xpose.msra.mxu0 0
        %1096 = vmatprep.subr.bf16.mxu0 0
        %1097 = vmatpush1.bf16.xpose.msra.mxu0 0
        %1098 = vmatprep.mubr.bf16.mxu0 0
        %1099 = vmatmul.mubr.bf16.gmra.mrb[0].mxu0 %v1061
        %v1100 = vpop.f32.mrb[0].mxu0
        %v1101 = vadd.f32 0.0, %v1100
        %v1102 = vpop.f32.mrb[0].mxu0
        %v1103 = vpop.f32.mrb[0].mxu0
        %v1104 = vpop.f32.mrb[0].mxu0
        %1105 = vdwg.mxu0
        %v1106 = vsel %vm718, %v1101, -inf
        %1107 = vmax.xlane.f32.xlu0 %v1106
        %v1108 = vpop.xlane.xlu0 %1107
        %v1109 = vsub.f32 %v1101, %v1108
        %v1110 = vmul.f32 %v1109, 1.442695
        %v1111 = vpow.pop %v1110
        %v1112 = vsel %vm718, %v1111, 0.0
        %1113 = vadd.xlane.f32.xlu0 %v1112
        %v1114 = vpop.xlane.xlu0 %1113
        %v1115 = vrcp.pop %v1114
        %v1116 = vmul.f32 %v1111, %v1115
        %s1117 = scalar_lea.vmem %s519, 24 [#allocation16]
        %1118 = vst.msk [vmem:[%s1117] sm:$0xff] %vm718, %v1116
        %v1119 = vpack.c.bf16 %v1116, %v1116
        %1120 = vrot.lane.b32.xlu0 %v895, 104
        %v1121 = vpop.permute.xlu0 %1120
        %v1123 = vsel %vm718, %v1119, 0
        %v1126 = vsel %vm781, %v1121, 0
        %1128 = vmatprep.subr.bf16.mxu0 0
        %1129 = vmatpush1.bf16.msra.mxu0 %v1126
        %1130 = vmatprep.subr.bf16.mxu0 0
        %1131 = vmatpush1.bf16.msra.mxu0 0
        %1132 = vmatprep.subr.bf16.mxu0 0
        %1133 = vmatpush1.bf16.msra.mxu0 0
        %1134 = vmatprep.subr.bf16.mxu0 0
        %1135 = vmatpush1.bf16.msra.mxu0 0
        %1136 = vmatprep.subr.bf16.mxu0 0
        %1137 = vmatpush1.bf16.msra.mxu0 0
        %1138 = vmatprep.subr.bf16.mxu0 0
        %1139 = vmatpush1.bf16.msra.mxu0 0
        %1140 = vmatprep.subr.bf16.mxu0 0
        %1141 = vmatpush1.bf16.msra.mxu0 0
        %1142 = vmatprep.subr.bf16.mxu0 0
        %1143 = vmatpush1.bf16.msra.mxu0 0
        %1144 = vmatprep.subr.bf16.mxu0 0
        %1145 = vmatpush1.bf16.msra.mxu0 0
        %1146 = vmatprep.subr.bf16.mxu0 0
        %1147 = vmatpush1.bf16.msra.mxu0 0
        %1148 = vmatprep.subr.bf16.mxu0 0
        %1149 = vmatpush1.bf16.msra.mxu0 0
        %1150 = vmatprep.subr.bf16.mxu0 0
        %1151 = vmatpush1.bf16.msra.mxu0 0
        %1152 = vmatprep.subr.bf16.mxu0 0
        %1153 = vmatpush1.bf16.msra.mxu0 0
        %1154 = vmatprep.subr.bf16.mxu0 0
        %1155 = vmatpush1.bf16.msra.mxu0 0
        %1156 = vmatprep.subr.bf16.mxu0 0
        %1157 = vmatpush1.bf16.msra.mxu0 0
        %1158 = vmatprep.subr.bf16.mxu0 0
        %1159 = vmatpush1.bf16.msra.mxu0 0
        %1160 = vmatprep.mubr.bf16.mxu0 0
        %1161 = vmatmul.mubr.bf16.gmra.mrb[0].mxu0 %v1123
        %v1162 = vpop.f32.mrb[0].mxu0
        %v1163 = vadd.f32 0.0, %v1162
        %v1164 = vpop.f32.mrb[0].mxu0
        %v1165 = vpop.f32.mrb[0].mxu0
        %v1166 = vpop.f32.mrb[0].mxu0
        %1167 = vdwg.mxu0
        %1169 = vrot.lane.b32.xlu0 %v939, 8
        %v1170 = vpop.permute.xlu0 %1169
        %1173 = vrot.lane.b32.xlu0 %v1051, 16
        %v1174 = vpop.permute.xlu0 %1173
        %1177 = vrot.lane.b32.xlu0 %v1163, 24
        %v1178 = vpop.permute.xlu0 %1177
        %v1180 = vsel %vm718, %v820, %v1170
        %vm1181 = vcmask 130048
        %v1182 = vsel %vm1181, %v1180, %v1174
        %vm1183 = vcmask 195584
        %v1184 = vsel %vm1183, %v1182, %v1178
        %v1185 = vpack.c.bf16 %v1184, %v1184
        %v1186 = vld [vmem:[#allocation13] sm:$0xf]
        %v1187 = vld [vmem:[#allocation13 + $0x4] sm:$0xf]
        %v1188 = vld [vmem:[#allocation13 + $0x8] sm:$0xf]
        %v1189 = vld [vmem:[#allocation13 + $0xc] sm:$0xf]
        %v1194 = vunpack.c.l.b16 %v1186
        %v1195 = vunpack.c.l.b16 %v1187
        %v1196 = vunpack.c.l.b16 %v1188
        %v1197 = vunpack.c.l.b16 %v1189
        %v1198 = vpack.c.b16 %v1195, %v1194
        %v1199 = vpack.c.b16 %v1197, %v1196
        %v1203 = vsel %vm671, %v1185, 0
        %1205 = vmatprep.subr.bf16.mxu0 0
        %1206 = vmatpush1.bf16.msra.mxu0 %v1198
        %1207 = vmatprep.subr.bf16.mxu0 0
        %1208 = vmatpush1.bf16.msra.mxu0 %v1199
        %1209 = vmatprep.subr.bf16.mxu0 0
        %1210 = vmatpush1.bf16.msra.mxu0 0
        %1211 = vmatprep.subr.bf16.mxu0 0
        %1212 = vmatpush1.bf16.msra.mxu0 0
        %1213 = vmatprep.subr.bf16.mxu0 0
        %1214 = vmatpush1.bf16.msra.mxu0 0
        %1215 = vmatprep.subr.bf16.mxu0 0
        %1216 = vmatpush1.bf16.msra.mxu0 0
        %1217 = vmatprep.subr.bf16.mxu0 0
        %1218 = vmatpush1.bf16.msra.mxu0 0
        %1219 = vmatprep.subr.bf16.mxu0 0
        %1220 = vmatpush1.bf16.msra.mxu0 0
        %1221 = vmatprep.subr.bf16.mxu0 0
        %1222 = vmatpush1.bf16.msra.mxu0 0
        %1223 = vmatprep.subr.bf16.mxu0 0
        %1224 = vmatpush1.bf16.msra.mxu0 0
        %1225 = vmatprep.subr.bf16.mxu0 0
        %1226 = vmatpush1.bf16.msra.mxu0 0
        %1227 = vmatprep.subr.bf16.mxu0 0
        %1228 = vmatpush1.bf16.msra.mxu0 0
        %1229 = vmatprep.subr.bf16.mxu0 0
        %1230 = vmatpush1.bf16.msra.mxu0 0
        %1231 = vmatprep.subr.bf16.mxu0 0
        %1232 = vmatpush1.bf16.msra.mxu0 0
        %1233 = vmatprep.subr.bf16.mxu0 0
        %1234 = vmatpush1.bf16.msra.mxu0 0
        %1235 = vmatprep.subr.bf16.mxu0 0
        %1236 = vmatpush1.bf16.msra.mxu0 0
        %1237 = vmatprep.mubr.bf16.mxu0 0
        %1238 = vmatmul.mubr.bf16.gmra.mrb[0].mxu0 %v1203
        %v1239 = vpop.f32.mrb[0].mxu0
        %v1240 = vadd.f32 %v653, %v1239
        %v1241 = vpop.f32.mrb[0].mxu0
        %v1242 = vpop.f32.mrb[0].mxu0
        %v1243 = vpop.f32.mrb[0].mxu0
        %1244 = vdwg.mxu0
        %v1245 = vsel %vm671, %v1240, 0.0
        %1246 = vadd.xlane.f32.xlu0 %v1245
        %v1247 = vpop.xlane.xlu0 %1246
        %v1248 = vrcp.pop 32.0
        %v1249 = vmul.f32 %v1247, %v1248
        %v1250 = vsub.f32 %v1240, %v1249
        %v1251 = vmul.f32 %v1250, %v1250
        %v1252 = vsel %vm671, %v1251, 0.0
        %1253 = vadd.xlane.f32.xlu0 %v1252
        %v1254 = vpop.xlane.xlu0 %1253
        %v1255 = vmul.f32 %v1254, %v1248
        %v1256 = vadd.f32 %v1255, 1e-06
        %v1257 = vrsqrt.pop %v1256
        %v1258 = vmul.f32 %v1250, %v1257
        %v1259 = vld [vmem:[%s7] sm:$0x1]
        %v1261 = vlaneseq
        %v1262 = vshrl.u32 %v1261, 7
        %v1263 = vsub.s32 0, %v1262
        %v1264 = vrot.slane %v1259, %v1263
        %v1266 = vmul.f32 %v1258, %v1264
        %v1267 = vld [vmem:[%s8] sm:$0x1]
        %v1269 = vlaneseq
        %v1270 = vshrl.u32 %v1269, 7
        %v1271 = vsub.s32 0, %v1270
        %v1272 = vrot.slane %v1267, %v1271
        %v1274 = vadd.f32 %v1266, %v1272
        %1275 = vst.msk [vmem:[%s512] sm:$0xff] %vm671, %v1274
        %s1276 = sand.u32 %s264, 1
        %s1277 = scalar_lea.sflag [#allocation6], %s1276
        %s1278 = sand.u32 %s264, 1
        %s1279 = smul.addr %s1278, 8
        %s1280 = scalar_lea.vmem [#allocation15], %s1279
        %s1281 = sand.u32 %s292, 1
        %s1282 = scalar_lea.sflag [#allocation17], %s1281
        %s1283 = sand.u32 %s292, 1
        %s1284 = smul.addr %s1283, 32
        %s1285 = scalar_lea.vmem [#allocation16], %s1284
        // Predicated region
        $region85: #{tpu_custom_call.1} parent=55 // pred_check
          %p1286 = pneg %p274
        $region86: #{tpu_custom_call.1} parent=55 // pred_check_branch
          %1288 = sbr.rel (%p1286) target = $region88
        $region87: #{tpu_custom_call.1} parent=55 // pred_region
          %s1290 = ssub.s32 128, 128
          %1291 = vsyncadd %s1277, %s1290
          %s1292 = sadd.s32 %s41, %s40
          %s1293 = smul.addr %s1292, 128
          %s1294 = scalar_lea.hbm %s9, %s1293
          %s1296 = sshll.u32 %s1280, 4
          %s1297 = int_to_ptr.vmem [resolvable:$true] %s1296
          %1299 = dma.vmem_to_hbm [thread:$0]  %s1297, 128, %s1294, %s1277
        $region88: #{tpu_custom_call.1} parent=55 // pred_fallthru
          _
        // Predicated region
        $region89: #{tpu_custom_call.1} parent=55 // pred_check
          %p1300 = pneg %p302
        $region90: #{tpu_custom_call.1} parent=55 // pred_check_branch
          %1302 = sbr.rel (%p1300) target = $region92
        $region91: #{tpu_custom_call.1} parent=55 // pred_region
          %s1304 = ssub.s32 512, 512
          %1305 = vsyncadd %s1282, %s1304
          %s1306 = smul.addr %s40, 4
          %s1307 = sadd.s32 %s41, %s1306
          %s1308 = smul.addr %s1307, 128
          %s1309 = scalar_lea.hbm %s10, %s1308
          %s1310 = sshll.u32 %s1285, 4
          %s1311 = int_to_ptr.vmem [resolvable:$true] %s1310
          %1316 = dma.vmem_to_hbm [thread:$0]  %s1311, 512, %s1309, %s1282, 128, 128, 8
        $region92: #{tpu_custom_call.1} parent=55 // pred_fallthru
          _
      $region56: #{tpu_custom_call.1} parent=5 // pred_fallthru
        _
      %p1317 = scmp.le.s32.totalorder 2, %s31
      // Predicated region
      $region93: #{tpu_custom_call.1} parent=5 // pred_check
        %p1318 = pneg %p1317
      $region94: #{tpu_custom_call.1} parent=5 // pred_check_branch
        %1320 = sbr.rel (%p1318) target = $region96
      $region95: #{tpu_custom_call.1} parent=5 // pred_region
        %s1321 = ssub.s32 %s31, 2
        // Predicated region
        $region97: #{tpu_custom_call.1} parent=95 // pred_check
          %p1322 = pneg %p280
        $region98: #{tpu_custom_call.1} parent=95 // pred_check_branch
          %1324 = sbr.rel (%p1322) target = $region100
        $region99: #{tpu_custom_call.1} parent=95 // pred_region
          %s1325 = sand.u32 %s265, 1
          %s1326 = scalar_lea.sflag [#allocation6], %s1325
          %s1327 = sand.u32 %s265, 1
          %s1328 = smul.addr %s1327, 8
          %s1329 = scalar_lea.vmem [#allocation15], %s1328
          %1330 = dma.done %s1326, 128
        $region100: #{tpu_custom_call.1} parent=95 // pred_fallthru
          _
        // Predicated region
        $region101: #{tpu_custom_call.1} parent=95 // pred_check
          %p1331 = pneg %p308
        $region102: #{tpu_custom_call.1} parent=95 // pred_check_branch
          %1333 = sbr.rel (%p1331) target = $region104
        $region103: #{tpu_custom_call.1} parent=95 // pred_region
          %s1334 = sand.u32 %s293, 1
          %s1335 = scalar_lea.sflag [#allocation17], %s1334
          %s1336 = sand.u32 %s293, 1
          %s1337 = smul.addr %s1336, 32
          %s1338 = scalar_lea.vmem [#allocation16], %s1337
          %1339 = dma.done %s1335, 512
        $region104: #{tpu_custom_call.1} parent=95 // pred_fallthru
          _
      $region96: #{tpu_custom_call.1} parent=5 // pred_fallthru
        _
    $region6: #{tpu_custom_call.1} parent=1 // loop_footer
      %s35 = sadd.s32 1, %s31
    $region7: #{tpu_custom_call.1} parent=1 // loop_footer_branch
      %30 = sbr.rel target = $region3
    $region8: #{tpu_custom_call.1} parent=1 // loop_exit
      _
    %1340 = vsyncpa [#allocation5], 1
    %s1341 = scalar_lea.sflag [#allocation5], 1
    %1342 = vsyncpa %s1341, 1
    %1343 = vsyncpa [#allocation8], 1
    %s1344 = scalar_lea.sflag [#allocation8], 1
    %1345 = vsyncpa %s1344, 1
    %1346 = vsyncpa [#allocation11], 1
    %1347 = vsyncpa [#allocation14], 1
    %1348 = vsyncpa [#allocation6], 1
    %s1349 = scalar_lea.sflag [#allocation6], 1
    %1350 = vsyncpa %s1349, 1
    %1351 = vsyncpa [#allocation17], 1
    %s1352 = scalar_lea.sflag [#allocation17], 1
    %1353 = vsyncpa %s1352, 1

</llo_original>
